<compile_context>
chip_gen: v6e
topology: v6e:2x2x1
jax: 0.10.0
libtpu: 0.0.40
codegen_flags: <defaults>
</compile_context>

<pallas_src>
import jax
import jax.numpy as jnp
from jax import lax
from jax.experimental import pallas as pl
from jax.experimental.pallas import tpu as pltpu


def _downsample_kernel(ee_ref, eo_ref, oe_ref, oo_ref, w_ref, b_ref, o_ref):
    """One (batch, out-channel-tile, row-tile) grid step.

    ee_ref: (1, TH+1, Wo+1, C)  even padded rows (2i, plus halo row 2i+2), even cols 2j
    eo_ref: (1, TH+1, Wo,   C)  even padded rows, odd cols 2j+1
    oe_ref: (1, TH,   Wo+1, C)  odd padded rows 2i+1, even cols
    oo_ref: (1, TH,   Wo,   C)  odd padded rows 2i+1, odd cols
    w_ref:  (9, C, TCo)         per-tap weights, tap index = kh*3 + kw
    b_ref:  (1, TCo)            bias (f32)
    o_ref:  (1, TH, Wo, TCo)    output tile
    """
    _, TH, Wo, TCo = o_ref.shape
    C = oo_ref.shape[-1]

    ee = ee_ref[0]          # (TH+1, Wo+1, C)
    eo = eo_ref[0]          # (TH+1, Wo,   C)
    oe = oe_ref[0]          # (TH,   Wo+1, C)
    oo = oo_ref[0]          # (TH,   Wo,   C)

    def tap_dot(tap, k):
        # (TH, Wo, C) x (C, TCo) -> (TH*Wo, TCo); f32 accumulation on the MXU.
        return jnp.dot(tap.reshape(TH * Wo, C), w_ref[k],
                       preferred_element_type=jnp.float32)

    # kh = 0: even rows 2i
    acc = tap_dot(ee[0:TH, 0:Wo, :], 0)
    acc += tap_dot(eo[0:TH, :, :], 1)
    acc += tap_dot(ee[0:TH, 1:Wo + 1, :], 2)
    # kh = 1: odd rows 2i+1
    acc += tap_dot(oe[:, 0:Wo, :], 3)
    acc += tap_dot(oo[:, :, :], 4)
    acc += tap_dot(oe[:, 1:Wo + 1, :], 5)
    # kh = 2: even rows 2i+2 == even-row arrays shifted down by one output row
    acc += tap_dot(ee[1:TH + 1, 0:Wo, :], 6)
    acc += tap_dot(eo[1:TH + 1, :, :], 7)
    acc += tap_dot(ee[1:TH + 1, 1:Wo + 1, :], 8)

    acc = acc + b_ref[...]                                    # (1, TCo) f32 broadcast
    o_ref[0] = acc.reshape(TH, Wo, TCo).astype(o_ref.dtype)


def _pick_row_tile(ho, wo, c, tco, isz_x, isz_w, budget_bytes):
    """Largest row tile whose full per-step VMEM footprint fits the budget."""
    row_in_elems = (2 * wo + 1) * c                     # one padded row, all cols
    w_bytes = (9 * c * tco + tco) * isz_w
    best = 1
    for th in range(1, ho + 1):
        in_bytes = (2 * th + 1) * row_in_elems * isz_x  # ee+eo+oe+oo for this tile
        out_bytes = th * wo * tco * isz_x
        dbuf = 2 * (in_bytes + out_bytes + w_bytes)     # Pallas double-buffers blocks
        live = th * wo * tco * 4 + 2 * th * wo * c * isz_x  # f32 acc + ~2 live taps
        if dbuf + live <= budget_bytes:
            best = th
    return best


def _downsample_nhwc(x, w_oihw, bias):
    """Strided 3x3 conv (stride=2, padding=1) on NHWC input, NHWC output."""
    N, H, W, C = x.shape
    Ho = (H + 1) // 2
    Wo = (W + 1) // 2
    x_dt = x.dtype
    isz_x = jnp.dtype(x_dt).itemsize

    # Weights OIHW -> (kh, kw, ci, co) -> (9, C, C); cast so bf16 activations take
    # the native bf16 MXU path (accumulation stays f32 in-kernel).
    w_all = jnp.transpose(w_oihw, (2, 3, 1, 0)).reshape(9, C, C).astype(x_dt)
    b2d = bias.reshape(1, C).astype(jnp.float32)
    isz_w = jnp.dtype(w_all.dtype).itemsize

    # Output-channel tiling: keep the whole (9, C, C) weight block resident unless
    # it is large; then tile 256-wide (matches v6e/v7x 256-wide MXUs).
    w_resident = 2 * 9 * C * C * isz_w
    if w_resident > 12 * 1024 * 1024 and C % 256 == 0:
        TCo = 256
    elif w_resident > 12 * 1024 * 1024 and C % 128 == 0:
        TCo = 128
    else:
        TCo = C
    n_co = C // TCo

    # VMEM budget adapts to the chip generation (v7x 64 MiB vs v5e/v6e 128 MiB).
    try:
        vmem_cap = int(pltpu.get_tpu_info().vmem_capacity_bytes)
    except Exception:
        vmem_cap = 64 * 1024 * 1024
    budget = min(max(vmem_cap // 3, 16 * 1024 * 1024), 40 * 1024 * 1024)
    vmem_limit = int(max(min(vmem_cap - 8 * 1024 * 1024, 96 * 1024 * 1024),
                         32 * 1024 * 1024))

    TH = _pick_row_tile(Ho, Wo, C, TCo, isz_x, isz_w, budget)
    n_t = -(-Ho // TH)              # non-divisor Ho: pad the row grid up
    TH = -(-Ho // n_t)              # rebalance tiles (still within budget)
    Ho_pad = n_t * TH

    # ---- stage the padded image as an exact partition (~1.0x traffic) ----
    Wp = 2 * Wo + 1
    x_pad = jnp.pad(x, ((0, 0), (1, 2 * Ho_pad - H), (1, 2 * Wo - W), (0, 0)))
    E = x_pad[:, 0::2]                       # (N, Ho_pad+1, Wp, C) even padded rows
    O = x_pad[:, 1::2]                       # (N, Ho_pad,   Wp, C) odd  padded rows
    # Per-row-tile windows of TH+1 even rows (one duplicated halo row per tile).
    E_body = E[:, :Ho_pad].reshape(N, n_t, TH, Wp, C)
    E_halo = E[:, TH::TH][:, :, None]        # (N, n_t, 1, Wp, C): rows (t+1)*TH
    E_win = jnp.concatenate([E_body, E_halo], axis=2)      # (N, n_t, TH+1, Wp, C)

    ee = E_win[..., 0::2, :].reshape(N * n_t, TH + 1, Wo + 1, C)
    eo = E_win[..., 1::2, :].reshape(N * n_t, TH + 1, Wo, C)
    oe = O[..., 0::2, :]                     # (N, Ho_pad, Wo+1, C)
    oo = O[..., 1::2, :]                     # (N, Ho_pad, Wo,   C)

    grid = (N, n_co, n_t)                    # co OUTSIDE t: weight block stays resident

    flops = 2 * N * Ho_pad * Wo * 9 * C * C
    bytes_accessed = (N * (2 * Ho_pad + 1 + n_t) * Wp * C * isz_x * n_co
                      + N * Ho_pad * Wo * C * isz_x
                      + (9 * C * C + C) * isz_w)

    out = pl.pallas_call(
        _downsample_kernel,
        out_shape=jax.ShapeDtypeStruct((N, Ho_pad, Wo, C), x_dt),
        grid=grid,
        in_specs=[
            pl.BlockSpec((1, TH + 1, Wo + 1, C),
                         lambda n, co, t: (n * n_t + t, 0, 0, 0)),
            pl.BlockSpec((1, TH + 1, Wo, C),
                         lambda n, co, t: (n * n_t + t, 0, 0, 0)),
            pl.BlockSpec((1, TH, Wo + 1, C), lambda n, co, t: (n, t, 0, 0)),
            pl.BlockSpec((1, TH, Wo, C), lambda n, co, t: (n, t, 0, 0)),
            pl.BlockSpec((9, C, TCo), lambda n, co, t: (0, 0, co)),
            pl.BlockSpec((1, TCo), lambda n, co, t: (0, co)),
        ],
        out_specs=pl.BlockSpec((1, TH, Wo, TCo), lambda n, co, t: (n, t, 0, co)),
        compiler_params=pltpu.CompilerParams(
            dimension_semantics=("parallel", "parallel", "parallel"),
            vmem_limit_bytes=vmem_limit,
        ),
        cost_estimate=pl.CostEstimate(
            flops=flops, transcendentals=0, bytes_accessed=bytes_accessed),
    )(ee, eo, oe, oo, w_all, b2d)

    return out[:, :Ho]                       # drop padded rows (non-divisor Ho)


@jax.jit
def downsample_nhwc(x_nhwc, w_oihw, bias):
    """NHWC entry point (skips the NCHW<->NHWC transposes for NHWC callers)."""
    return _downsample_nhwc(x_nhwc, w_oihw, bias)


@jax.jit
def downsample(x_nchw, w_oihw, bias):
    """PyTorch-layout entry: Conv2d(C, C, 3, stride=2, padding=1) on NCHW."""
    x_nhwc = jnp.transpose(x_nchw, (0, 2, 3, 1))   # fuses with the pad/staging copy
    out_nhwc = _downsample_nhwc(x_nhwc, w_oihw, bias)
    return jnp.transpose(out_nhwc, (0, 3, 1, 2))   # NHWC -> NCHW


def _reference(x_nchw, w_oihw, bias):
    """Plain-JAX reference (PyTorch Conv2d semantics) for verification."""
    out = lax.conv_general_dilated(
        x_nchw.astype(jnp.float32),
        w_oihw.astype(jnp.float32),
        window_strides=(2, 2),
        padding=((1, 1), (1, 1)),
        dimension_numbers=("NCHW", "OIHW", "NCHW"),
    )
    return out + bias.reshape(1, -1, 1, 1)


if __name__ == "__main__":
    key = jax.random.PRNGKey(0)
    k_x, k_w, k_b = jax.random.split(key, 3)

    N, C, H, W = 2, 4, 16, 16
    x = jax.random.normal(k_x, (N, C, H, W), dtype=jnp.float32)

    # Deterministic Conv2d(C, C, 3) parameters (PyTorch-style uniform init).
    fan_in = C * 3 * 3
    bound = 1.0 / (fan_in ** 0.5)
    w = jax.random.uniform(k_w, (C, C, 3, 3), jnp.float32, -bound, bound)
    b = jax.random.uniform(k_b, (C,), jnp.float32, -bound, bound)

    out = downsample(x, w, b)
    jax.block_until_ready(out)

    ref = _reference(x, w, b)
    assert out.shape == (N, C, H // 2, W // 2), out.shape
    err = float(jnp.max(jnp.abs(out - ref)))
    assert jnp.allclose(out, ref, atol=1e-4, rtol=1e-4), err

    # Odd spatial size exercises the asymmetric-padding path.
    x_odd = jax.random.normal(k_x, (1, C, 15, 15), dtype=jnp.float32)
    out_odd = downsample(x_odd, w, b)
    jax.block_until_ready(out_odd)
    ref_odd = _reference(x_odd, w, b)
    assert out_odd.shape == (1, C, 8, 8), out_odd.shape
    err_odd = float(jnp.max(jnp.abs(out_odd - ref_odd)))
    assert jnp.allclose(out_odd, ref_odd, atol=1e-4, rtol=1e-4), err_odd

    print("KERNEL_OK")
</pallas_src>

<mosaic_0001>
module attributes {stable_mosaic.version = 11 : i64} {
  func.func @_downsample_kernel(%arg0: i32, %arg1: i32, %arg2: i32, %arg3: memref<1x9x9x4xf32, #tpu.memory_space<vmem>>, %arg4: memref<1x9x8x4xf32, #tpu.memory_space<vmem>>, %arg5: memref<1x8x9x4xf32, #tpu.memory_space<vmem>>, %arg6: memref<1x8x8x4xf32, #tpu.memory_space<vmem>>, %arg7: memref<9x4x4xf32, #tpu.memory_space<vmem>>, %arg8: memref<1x4xf32, #tpu.memory_space<vmem>>, %arg9: memref<1x8x8x4xf32, #tpu.memory_space<vmem>>) attributes {dimension_semantics = [#tpu.dimension_semantics<parallel>, #tpu.dimension_semantics<parallel>, #tpu.dimension_semantics<parallel>], iteration_bounds = array<i64: 2, 1, 1>, scalar_prefetch = 0 : i64, scratch_operands = 0 : i64, tpu.core_type = #tpu.core_type<tc>, window_params = [{transform_indices = @transform_0, window_bounds = array<i64: 1, 9, 9, 4>}, {transform_indices = @transform_1, window_bounds = array<i64: 1, 9, 8, 4>}, {transform_indices = @transform_2, window_bounds = array<i64: 1, 8, 9, 4>}, {transform_indices = @transform_3, window_bounds = array<i64: 1, 8, 8, 4>}, {transform_indices = @transform_4, window_bounds = array<i64: 9, 4, 4>}, {transform_indices = @transform_5, window_bounds = array<i64: 1, 4>}, {transform_indices = @transform_6, window_bounds = array<i64: 1, 8, 8, 4>}]} {
    %c0 = arith.constant 0 : index
    %c0_0 = arith.constant 0 : index
    %c0_1 = arith.constant 0 : index
    %c0_2 = arith.constant 0 : index
    %0 = vector.load %arg3[%c0, %c0_0, %c0_1, %c0_2] : memref<1x9x9x4xf32, #tpu.memory_space<vmem>>, vector<1x9x9x4xf32>
    %1 = vector.shape_cast %0 : vector<1x9x9x4xf32> to vector<9x9x4xf32>
    %c0_3 = arith.constant 0 : index
    %c0_4 = arith.constant 0 : index
    %c0_5 = arith.constant 0 : index
    %c0_6 = arith.constant 0 : index
    %2 = vector.load %arg4[%c0_3, %c0_4, %c0_5, %c0_6] : memref<1x9x8x4xf32, #tpu.memory_space<vmem>>, vector<1x9x8x4xf32>
    %3 = vector.shape_cast %2 : vector<1x9x8x4xf32> to vector<9x8x4xf32>
    %c0_7 = arith.constant 0 : index
    %c0_8 = arith.constant 0 : index
    %c0_9 = arith.constant 0 : index
    %c0_10 = arith.constant 0 : index
    %4 = vector.load %arg5[%c0_7, %c0_8, %c0_9, %c0_10] : memref<1x8x9x4xf32, #tpu.memory_space<vmem>>, vector<1x8x9x4xf32>
    %5 = vector.shape_cast %4 : vector<1x8x9x4xf32> to vector<8x9x4xf32>
    %c0_11 = arith.constant 0 : index
    %c0_12 = arith.constant 0 : index
    %c0_13 = arith.constant 0 : index
    %c0_14 = arith.constant 0 : index
    %6 = vector.load %arg6[%c0_11, %c0_12, %c0_13, %c0_14] : memref<1x8x8x4xf32, #tpu.memory_space<vmem>>, vector<1x8x8x4xf32>
    %7 = vector.shape_cast %6 : vector<1x8x8x4xf32> to vector<8x8x4xf32>
    %8 = vector.extract_strided_slice %1 {offsets = [0, 0, 0], sizes = [8, 8, 4], strides = [1, 1, 1]} : vector<9x9x4xf32> to vector<8x8x4xf32>
    %9 = vector.shape_cast %8 : vector<8x8x4xf32> to vector<64x4xf32>
    %c0_15 = arith.constant 0 : index
    %c0_16 = arith.constant 0 : index
    %c0_17 = arith.constant 0 : index
    %10 = vector.load %arg7[%c0_15, %c0_16, %c0_17] : memref<9x4x4xf32, #tpu.memory_space<vmem>>, vector<1x4x4xf32>
    %11 = vector.shape_cast %10 : vector<1x4x4xf32> to vector<4x4xf32>
    %cst = arith.constant dense<0.000000e+00> : vector<64x4xf32>
    %12 = tpu.matmul %9, %11, %cst {dimension_numbers = #tpu.dot_dimension_numbers<[1], [0], [0], [1], [0, 0, 1, 1], [], []>} : vector<64x4xf32>, vector<4x4xf32>, vector<64x4xf32> -> vector<64x4xf32>
    %13 = vector.extract_strided_slice %3 {offsets = [0, 0, 0], sizes = [8, 8, 4], strides = [1, 1, 1]} : vector<9x8x4xf32> to vector<8x8x4xf32>
    %14 = vector.shape_cast %13 : vector<8x8x4xf32> to vector<64x4xf32>
    %c1 = arith.constant 1 : index
    %c0_18 = arith.constant 0 : index
    %c0_19 = arith.constant 0 : index
    %15 = vector.load %arg7[%c1, %c0_18, %c0_19] : memref<9x4x4xf32, #tpu.memory_space<vmem>>, vector<1x4x4xf32>
    %16 = vector.shape_cast %15 : vector<1x4x4xf32> to vector<4x4xf32>
    %cst_20 = arith.constant dense<0.000000e+00> : vector<64x4xf32>
    %17 = tpu.matmul %14, %16, %cst_20 {dimension_numbers = #tpu.dot_dimension_numbers<[1], [0], [0], [1], [0, 0, 1, 1], [], []>} : vector<64x4xf32>, vector<4x4xf32>, vector<64x4xf32> -> vector<64x4xf32>
    %18 = arith.addf %12, %17 : vector<64x4xf32>
    %19 = vector.extract_strided_slice %1 {offsets = [0, 1, 0], sizes = [8, 8, 4], strides = [1, 1, 1]} : vector<9x9x4xf32> to vector<8x8x4xf32>
    %20 = vector.shape_cast %19 : vector<8x8x4xf32> to vector<64x4xf32>
    %c2 = arith.constant 2 : index
    %c0_21 = arith.constant 0 : index
    %c0_22 = arith.constant 0 : index
    %21 = vector.load %arg7[%c2, %c0_21, %c0_22] : memref<9x4x4xf32, #tpu.memory_space<vmem>>, vector<1x4x4xf32>
    %22 = vector.shape_cast %21 : vector<1x4x4xf32> to vector<4x4xf32>
    %cst_23 = arith.constant dense<0.000000e+00> : vector<64x4xf32>
    %23 = tpu.matmul %20, %22, %cst_23 {dimension_numbers = #tpu.dot_dimension_numbers<[1], [0], [0], [1], [0, 0, 1, 1], [], []>} : vector<64x4xf32>, vector<4x4xf32>, vector<64x4xf32> -> vector<64x4xf32>
    %24 = arith.addf %18, %23 : vector<64x4xf32>
    %25 = vector.extract_strided_slice %5 {offsets = [0, 0, 0], sizes = [8, 8, 4], strides = [1, 1, 1]} : vector<8x9x4xf32> to vector<8x8x4xf32>
    %26 = vector.shape_cast %25 : vector<8x8x4xf32> to vector<64x4xf32>
    %c3 = arith.constant 3 : index
    %c0_24 = arith.constant 0 : index
    %c0_25 = arith.constant 0 : index
    %27 = vector.load %arg7[%c3, %c0_24, %c0_25] : memref<9x4x4xf32, #tpu.memory_space<vmem>>, vector<1x4x4xf32>
    %28 = vector.shape_cast %27 : vector<1x4x4xf32> to vector<4x4xf32>
    %cst_26 = arith.constant dense<0.000000e+00> : vector<64x4xf32>
    %29 = tpu.matmul %26, %28, %cst_26 {dimension_numbers = #tpu.dot_dimension_numbers<[1], [0], [0], [1], [0, 0, 1, 1], [], []>} : vector<64x4xf32>, vector<4x4xf32>, vector<64x4xf32> -> vector<64x4xf32>
    %30 = arith.addf %24, %29 : vector<64x4xf32>
    %31 = vector.shape_cast %7 : vector<8x8x4xf32> to vector<64x4xf32>
    %c4 = arith.constant 4 : index
    %c0_27 = arith.constant 0 : index
    %c0_28 = arith.constant 0 : index
    %32 = vector.load %arg7[%c4, %c0_27, %c0_28] : memref<9x4x4xf32, #tpu.memory_space<vmem>>, vector<1x4x4xf32>
    %33 = vector.shape_cast %32 : vector<1x4x4xf32> to vector<4x4xf32>
    %cst_29 = arith.constant dense<0.000000e+00> : vector<64x4xf32>
    %34 = tpu.matmul %31, %33, %cst_29 {dimension_numbers = #tpu.dot_dimension_numbers<[1], [0], [0], [1], [0, 0, 1, 1], [], []>} : vector<64x4xf32>, vector<4x4xf32>, vector<64x4xf32> -> vector<64x4xf32>
    %35 = arith.addf %30, %34 : vector<64x4xf32>
    %36 = vector.extract_strided_slice %5 {offsets = [0, 1, 0], sizes = [8, 8, 4], strides = [1, 1, 1]} : vector<8x9x4xf32> to vector<8x8x4xf32>
    %37 = vector.shape_cast %36 : vector<8x8x4xf32> to vector<64x4xf32>
    %c5 = arith.constant 5 : index
    %c0_30 = arith.constant 0 : index
    %c0_31 = arith.constant 0 : index
    %38 = vector.load %arg7[%c5, %c0_30, %c0_31] : memref<9x4x4xf32, #tpu.memory_space<vmem>>, vector<1x4x4xf32>
    %39 = vector.shape_cast %38 : vector<1x4x4xf32> to vector<4x4xf32>
    %cst_32 = arith.constant dense<0.000000e+00> : vector<64x4xf32>
    %40 = tpu.matmul %37, %39, %cst_32 {dimension_numbers = #tpu.dot_dimension_numbers<[1], [0], [0], [1], [0, 0, 1, 1], [], []>} : vector<64x4xf32>, vector<4x4xf32>, vector<64x4xf32> -> vector<64x4xf32>
    %41 = arith.addf %35, %40 : vector<64x4xf32>
    %42 = vector.extract_strided_slice %1 {offsets = [1, 0, 0], sizes = [8, 8, 4], strides = [1, 1, 1]} : vector<9x9x4xf32> to vector<8x8x4xf32>
    %43 = vector.shape_cast %42 : vector<8x8x4xf32> to vector<64x4xf32>
    %c6 = arith.constant 6 : index
    %c0_33 = arith.constant 0 : index
    %c0_34 = arith.constant 0 : index
    %44 = vector.load %arg7[%c6, %c0_33, %c0_34] : memref<9x4x4xf32, #tpu.memory_space<vmem>>, vector<1x4x4xf32>
    %45 = vector.shape_cast %44 : vector<1x4x4xf32> to vector<4x4xf32>
    %cst_35 = arith.constant dense<0.000000e+00> : vector<64x4xf32>
    %46 = tpu.matmul %43, %45, %cst_35 {dimension_numbers = #tpu.dot_dimension_numbers<[1], [0], [0], [1], [0, 0, 1, 1], [], []>} : vector<64x4xf32>, vector<4x4xf32>, vector<64x4xf32> -> vector<64x4xf32>
    %47 = arith.addf %41, %46 : vector<64x4xf32>
    %48 = vector.extract_strided_slice %3 {offsets = [1, 0, 0], sizes = [8, 8, 4], strides = [1, 1, 1]} : vector<9x8x4xf32> to vector<8x8x4xf32>
    %49 = vector.shape_cast %48 : vector<8x8x4xf32> to vector<64x4xf32>
    %c7 = arith.constant 7 : index
    %c0_36 = arith.constant 0 : index
    %c0_37 = arith.constant 0 : index
    %50 = vector.load %arg7[%c7, %c0_36, %c0_37] : memref<9x4x4xf32, #tpu.memory_space<vmem>>, vector<1x4x4xf32>
    %51 = vector.shape_cast %50 : vector<1x4x4xf32> to vector<4x4xf32>
    %cst_38 = arith.constant dense<0.000000e+00> : vector<64x4xf32>
    %52 = tpu.matmul %49, %51, %cst_38 {dimension_numbers = #tpu.dot_dimension_numbers<[1], [0], [0], [1], [0, 0, 1, 1], [], []>} : vector<64x4xf32>, vector<4x4xf32>, vector<64x4xf32> -> vector<64x4xf32>
    %53 = arith.addf %47, %52 : vector<64x4xf32>
    %54 = vector.extract_strided_slice %1 {offsets = [1, 1, 0], sizes = [8, 8, 4], strides = [1, 1, 1]} : vector<9x9x4xf32> to vector<8x8x4xf32>
    %55 = vector.shape_cast %54 : vector<8x8x4xf32> to vector<64x4xf32>
    %c8 = arith.constant 8 : index
    %c0_39 = arith.constant 0 : index
    %c0_40 = arith.constant 0 : index
    %56 = vector.load %arg7[%c8, %c0_39, %c0_40] : memref<9x4x4xf32, #tpu.memory_space<vmem>>, vector<1x4x4xf32>
    %57 = vector.shape_cast %56 : vector<1x4x4xf32> to vector<4x4xf32>
    %cst_41 = arith.constant dense<0.000000e+00> : vector<64x4xf32>
    %58 = tpu.matmul %55, %57, %cst_41 {dimension_numbers = #tpu.dot_dimension_numbers<[1], [0], [0], [1], [0, 0, 1, 1], [], []>} : vector<64x4xf32>, vector<4x4xf32>, vector<64x4xf32> -> vector<64x4xf32>
    %59 = arith.addf %53, %58 : vector<64x4xf32>
    %c0_42 = arith.constant 0 : index
    %c0_43 = arith.constant 0 : index
    %60 = vector.load %arg8[%c0_42, %c0_43] : memref<1x4xf32, #tpu.memory_space<vmem>>, vector<1x4xf32>
    %61 = vector.broadcast %60 : vector<1x4xf32> to vector<64x4xf32>
    %62 = arith.addf %59, %61 : vector<64x4xf32>
    %63 = vector.shape_cast %62 : vector<64x4xf32> to vector<8x8x4xf32>
    %c0_44 = arith.constant 0 : index
    %c0_45 = arith.constant 0 : index
    %c0_46 = arith.constant 0 : index
    %c0_47 = arith.constant 0 : index
    %64 = vector.load %arg9[%c0_44, %c0_45, %c0_46, %c0_47] : memref<1x8x8x4xf32, #tpu.memory_space<vmem>>, vector<1x8x8x4xf32>
    %65 = vector.shape_cast %64 : vector<1x8x8x4xf32> to vector<8x8x4xf32>
    %66 = vector.shape_cast %63 : vector<8x8x4xf32> to vector<1x8x8x4xf32>
    tpu.vector_store %arg9[%c0_44, %c0_45, %c0_46, %c0_47], %66 {strides = array<i32>} : memref<1x8x8x4xf32, #tpu.memory_space<vmem>>, vector<1x8x8x4xf32>,
    return
  }
  func.func @transform_0(%arg0: i32, %arg1: i32, %arg2: i32) -> (i32, i32, i32, i32) {
    %c1_i32 = arith.constant 1 : i32
    %0 = arith.muli %arg0, %c1_i32 : i32
    %1 = arith.addi %0, %arg2 : i32
    %c0_i32 = arith.constant 0 : i32
    %c0_i32_0 = arith.constant 0 : i32
    %c0_i32_1 = arith.constant 0 : i32
    %c0_i32_2 = arith.constant 0 : i32
    return %1, %c0_i32, %c0_i32_0, %c0_i32_1 : i32, i32, i32, i32
  }
  func.func @transform_1(%arg0: i32, %arg1: i32, %arg2: i32) -> (i32, i32, i32, i32) {
    %c1_i32 = arith.constant 1 : i32
    %0 = arith.muli %arg0, %c1_i32 : i32
    %1 = arith.addi %0, %arg2 : i32
    %c0_i32 = arith.constant 0 : i32
    %c0_i32_0 = arith.constant 0 : i32
    %c0_i32_1 = arith.constant 0 : i32
    %c0_i32_2 = arith.constant 0 : i32
    return %1, %c0_i32, %c0_i32_0, %c0_i32_1 : i32, i32, i32, i32
  }
  func.func @transform_2(%arg0: i32, %arg1: i32, %arg2: i32) -> (i32, i32, i32, i32) {
    %c0_i32 = arith.constant 0 : i32
    %c0_i32_0 = arith.constant 0 : i32
    %c0_i32_1 = arith.constant 0 : i32
    return %arg0, %arg2, %c0_i32, %c0_i32_0 : i32, i32, i32, i32
  }
  func.func @transform_3(%arg0: i32, %arg1: i32, %arg2: i32) -> (i32, i32, i32, i32) {
    %c0_i32 = arith.constant 0 : i32
    %c0_i32_0 = arith.constant 0 : i32
    %c0_i32_1 = arith.constant 0 : i32
    return %arg0, %arg2, %c0_i32, %c0_i32_0 : i32, i32, i32, i32
  }
  func.func @transform_4(%arg0: i32, %arg1: i32, %arg2: i32) -> (i32, i32, i32) {
    %c0_i32 = arith.constant 0 : i32
    %c0_i32_0 = arith.constant 0 : i32
    %c0_i32_1 = arith.constant 0 : i32
    return %c0_i32, %c0_i32_0, %arg1 : i32, i32, i32
  }
  func.func @transform_5(%arg0: i32, %arg1: i32, %arg2: i32) -> (i32, i32) {
    %c0_i32 = arith.constant 0 : i32
    %c0_i32_0 = arith.constant 0 : i32
    return %c0_i32, %arg1 : i32, i32
  }
  func.func @transform_6(%arg0: i32, %arg1: i32, %arg2: i32) -> (i32, i32, i32, i32) {
    %c0_i32 = arith.constant 0 : i32
    %c0_i32_0 = arith.constant 0 : i32
    return %arg0, %arg2, %c0_i32, %arg1 : i32, i32, i32, i32
  }
}

</mosaic_0001>

<llo_original>
// kernel: downsample.1
$region0: #{downsample.1}
  #allocation0 [shape = 'u32[]', space=smem, size = 0x4, offset = 0x4, fixed_abs, tag = 'smem constant byte address 0x4 - core index']
  #allocation1 [shape = 'u32[144,128]{1,0:T(1,128)}', space=vmem, size = 0x12000, scoped, tag = 'internal scratch']
  %s0 = inlined_call_operand.vmem [shape: f32[2,9,9,4], index: 0, kind: input, shape index: {}]
  %s1 = inlined_call_operand.vmem [shape: f32[2,9,8,4], index: 1, kind: input, shape index: {}]
  %s2 = inlined_call_operand.vmem [shape: f32[2,8,9,4], index: 2, kind: input, shape index: {}]
  %s3 = inlined_call_operand.vmem [shape: f32[2,8,8,4], index: 3, kind: input, shape index: {}]
  %s4 = inlined_call_operand.vmem [shape: f32[9,4,4], index: 4, kind: input, shape index: {}]
  %s5 = inlined_call_operand.vmem [shape: f32[1,4], index: 5, kind: input, shape index: {}]
  %s6 = inlined_call_operand.vmem [shape: f32[2,8,8,4], index: 6, kind: output, shape index: {}]
  %s7 = sld [smem:[#allocation0]]
  $region57: #{downsample.1} parent=0
    _
  %s9 = ssub.s32 1, %s7
  %s10 = scalar_select 0, %s9, %s7
  loop: start=0, step=1, limit=4
  $region2: #{downsample.1} parent=0 // loop_pre_header
    _
  $region3: #{downsample.1} parent=0 // loop_header
    %s12 = sphi 0, %s16
    %p13 = scmp.ge.s32.totalorder %s12, 4
    %s19 = sphi 0, %s38
    %s20 = sphi 0, %s34
    %s21 = sphi 0, %s30
    %s22 = sphi 0, %s19
    %s23 = sphi 0, %s20
    %s24 = sphi 0, %s21
    %s25 = sphi 0, %s22
    %s26 = sphi 0, %s23
    %s27 = sphi 0, %s24
    %s43 = sphi 0, %s45
    %s46 = sphi 0, %s43
    %s47 = sphi 0, %s46
    %s63 = sphi 0, %s47
    %s71 = sphi 0, %s73
    %s74 = sphi 0, %s71
    %s75 = sphi 0, %s74
    %s91 = sphi 0, %s75
    %s99 = sphi 0, %s101
    %s102 = sphi 0, %s99
    %s103 = sphi 0, %s102
    %s119 = sphi 0, %s103
    %s127 = sphi 0, %s129
    %s130 = sphi 0, %s127
    %s131 = sphi 0, %s130
    %s147 = sphi 0, %s131
    %s153 = sphi 0, %s155
    %s156 = sphi 0, %s153
    %s157 = sphi 0, %s156
    %s173 = sphi 0, %s157
    %s179 = sphi 0, %s181
    %s182 = sphi 0, %s179
    %s183 = sphi 0, %s182
    %s199 = sphi 0, %s183
    %s209 = sphi 0, %s211
    %s212 = sphi 0, %s209
    %s213 = sphi 0, %s212
    %s229 = sphi 0, %s213
  $region4: #{downsample.1} parent=0 // loop_header_branch
    %15 = sbr.rel (%p13) target = $region8
  $region5: #{downsample.1} parent=0 // loop_body
    %s17 = ssub.s32 %s12, 1
    %s18 = ssub.s32 %s12, 2
    %s28 = sadd.s32 1, %s21
    %p29 = scmp.ge.s32.totalorder %s28, 1
    %s30 = scalar_select %p29, 0, %s28
    %s31 = sadd.s32 1, %s20
    %s32 = scalar_select %p29, %s31, %s20
    %p33 = scmp.ge.s32.totalorder %s32, 1
    %s34 = scalar_select %p33, 0, %s32
    %s35 = sadd.s32 1, %s19
    %s36 = scalar_select %p33, %s35, %s19
    %p37 = scmp.ge.s32.totalorder %s36, 2
    %s38 = scalar_select %p37, 0, %s36
    %s39 = sadd.s32 %s19, %s21
    %s40 = sadd.s32 %s38, %s30
    %s41 = ssub.s32 %s39, %s40
    %p42 = scmp.eq.s32.totalorder %s41, 0
    %s44 = sadd.s32 %s43, 1
    %s45 = scalar_select %p42, %s43, %s44
    %p48 = pneg %p42
    %p49 = scmp.eq.s32.totalorder %s12, 1
    %p50 = por %p48, %p49
    %p51 = scmp.ne.s32.totalorder %s43, %s46
    %p52 = scmp.eq.s32.totalorder %s12, 0
    %p53 = por %p51, %p52
    %p54 = scmp.ne.s32.totalorder %s43, %s46
    %p55 = scmp.eq.s32.totalorder %s17, 1
    %p56 = por %p54, %p55
    %p57 = scmp.ne.s32.totalorder %s46, %s47
    %p58 = scmp.eq.s32.totalorder %s17, 0
    %p59 = por %p57, %p58
    %p60 = scmp.ne.s32.totalorder %s46, %s47
    %p61 = scmp.eq.s32.totalorder %s18, 1
    %p62 = por %p60, %p61
    %p64 = scmp.ne.s32.totalorder %s47, %s63
    %p65 = scmp.eq.s32.totalorder %s18, 0
    %p66 = por %p64, %p65
    %s67 = sadd.s32 %s19, %s21
    %s68 = sadd.s32 %s38, %s30
    %s69 = ssub.s32 %s67, %s68
    %p70 = scmp.eq.s32.totalorder %s69, 0
    %s72 = sadd.s32 %s71, 1
    %s73 = scalar_select %p70, %s71, %s72
    %p76 = pneg %p70
    %p77 = scmp.eq.s32.totalorder %s12, 1
    %p78 = por %p76, %p77
    %p79 = scmp.ne.s32.totalorder %s71, %s74
    %p80 = scmp.eq.s32.totalorder %s12, 0
    %p81 = por %p79, %p80
    %p82 = scmp.ne.s32.totalorder %s71, %s74
    %p83 = scmp.eq.s32.totalorder %s17, 1
    %p84 = por %p82, %p83
    %p85 = scmp.ne.s32.totalorder %s74, %s75
    %p86 = scmp.eq.s32.totalorder %s17, 0
    %p87 = por %p85, %p86
    %p88 = scmp.ne.s32.totalorder %s74, %s75
    %p89 = scmp.eq.s32.totalorder %s18, 1
    %p90 = por %p88, %p89
    %p92 = scmp.ne.s32.totalorder %s75, %s91
    %p93 = scmp.eq.s32.totalorder %s18, 0
    %p94 = por %p92, %p93
    %s95 = ssub.s32 %s19, %s38
    %s96 = ssub.s32 %s21, %s30
    %s97 = sor.u32 %s95, %s96
    %p98 = scmp.eq.s32.totalorder %s97, 0
    %s100 = sadd.s32 %s99, 1
    %s101 = scalar_select %p98, %s99, %s100
    %p104 = pneg %p98
    %p105 = scmp.eq.s32.totalorder %s12, 1
    %p106 = por %p104, %p105
    %p107 = scmp.ne.s32.totalorder %s99, %s102
    %p108 = scmp.eq.s32.totalorder %s12, 0
    %p109 = por %p107, %p108
    %p110 = scmp.ne.s32.totalorder %s99, %s102
    %p111 = scmp.eq.s32.totalorder %s17, 1
    %p112 = por %p110, %p111
    %p113 = scmp.ne.s32.totalorder %s102, %s103
    %p114 = scmp.eq.s32.totalorder %s17, 0
    %p115 = por %p113, %p114
    %p116 = scmp.ne.s32.totalorder %s102, %s103
    %p117 = scmp.eq.s32.totalorder %s18, 1
    %p118 = por %p116, %p117
    %p120 = scmp.ne.s32.totalorder %s103, %s119
    %p121 = scmp.eq.s32.totalorder %s18, 0
    %p122 = por %p120, %p121
    %s123 = ssub.s32 %s19, %s38
    %s124 = ssub.s32 %s21, %s30
    %s125 = sor.u32 %s123, %s124
    %p126 = scmp.eq.s32.totalorder %s125, 0
    %s128 = sadd.s32 %s127, 1
    %s129 = scalar_select %p126, %s127, %s128
    %p132 = pneg %p126
    %p133 = scmp.eq.s32.totalorder %s12, 1
    %p134 = por %p132, %p133
    %p135 = scmp.ne.s32.totalorder %s127, %s130
    %p136 = scmp.eq.s32.totalorder %s12, 0
    %p137 = por %p135, %p136
    %p138 = scmp.ne.s32.totalorder %s127, %s130
    %p139 = scmp.eq.s32.totalorder %s17, 1
    %p140 = por %p138, %p139
    %p141 = scmp.ne.s32.totalorder %s130, %s131
    %p142 = scmp.eq.s32.totalorder %s17, 0
    %p143 = por %p141, %p142
    %p144 = scmp.ne.s32.totalorder %s130, %s131
    %p145 = scmp.eq.s32.totalorder %s18, 1
    %p146 = por %p144, %p145
    %p148 = scmp.ne.s32.totalorder %s131, %s147
    %p149 = scmp.eq.s32.totalorder %s18, 0
    %p150 = por %p148, %p149
    %s151 = ssub.s32 %s20, %s34
    %p152 = scmp.eq.s32.totalorder %s151, 0
    %s154 = sadd.s32 %s153, 1
    %s155 = scalar_select %p152, %s153, %s154
    %p158 = pneg %p152
    %p159 = scmp.eq.s32.totalorder %s12, 1
    %p160 = por %p158, %p159
    %p161 = scmp.ne.s32.totalorder %s153, %s156
    %p162 = scmp.eq.s32.totalorder %s12, 0
    %p163 = por %p161, %p162
    %p164 = scmp.ne.s32.totalorder %s153, %s156
    %p165 = scmp.eq.s32.totalorder %s17, 1
    %p166 = por %p164, %p165
    %p167 = scmp.ne.s32.totalorder %s156, %s157
    %p168 = scmp.eq.s32.totalorder %s17, 0
    %p169 = por %p167, %p168
    %p170 = scmp.ne.s32.totalorder %s156, %s157
    %p171 = scmp.eq.s32.totalorder %s18, 1
    %p172 = por %p170, %p171
    %p174 = scmp.ne.s32.totalorder %s157, %s173
    %p175 = scmp.eq.s32.totalorder %s18, 0
    %p176 = por %p174, %p175
    %s177 = ssub.s32 %s20, %s34
    %p178 = scmp.eq.s32.totalorder %s177, 0
    %s180 = sadd.s32 %s179, 1
    %s181 = scalar_select %p178, %s179, %s180
    %p184 = pneg %p178
    %p185 = scmp.eq.s32.totalorder %s12, 1
    %p186 = por %p184, %p185
    %p187 = scmp.ne.s32.totalorder %s179, %s182
    %p188 = scmp.eq.s32.totalorder %s12, 0
    %p189 = por %p187, %p188
    %p190 = scmp.ne.s32.totalorder %s179, %s182
    %p191 = scmp.eq.s32.totalorder %s17, 1
    %p192 = por %p190, %p191
    %p193 = scmp.ne.s32.totalorder %s182, %s183
    %p194 = scmp.eq.s32.totalorder %s17, 0
    %p195 = por %p193, %p194
    %p196 = scmp.ne.s32.totalorder %s182, %s183
    %p197 = scmp.eq.s32.totalorder %s18, 1
    %p198 = por %p196, %p197
    %p200 = scmp.ne.s32.totalorder %s183, %s199
    %p201 = scmp.eq.s32.totalorder %s18, 0
    %p202 = por %p200, %p201
    %s203 = ssub.s32 %s19, %s38
    %s204 = ssub.s32 %s21, %s30
    %s205 = sor.u32 %s203, %s204
    %s206 = ssub.s32 %s20, %s34
    %s207 = sor.u32 %s205, %s206
    %p208 = scmp.eq.s32.totalorder %s207, 0
    %s210 = sadd.s32 %s209, 1
    %s211 = scalar_select %p208, %s209, %s210
    %p214 = pneg %p208
    %p215 = scmp.eq.s32.totalorder %s12, 1
    %p216 = por %p214, %p215
    %p217 = scmp.ne.s32.totalorder %s209, %s212
    %p218 = scmp.eq.s32.totalorder %s12, 0
    %p219 = por %p217, %p218
    %p220 = scmp.ne.s32.totalorder %s209, %s212
    %p221 = scmp.eq.s32.totalorder %s17, 1
    %p222 = por %p220, %p221
    %p223 = scmp.ne.s32.totalorder %s212, %s213
    %p224 = scmp.eq.s32.totalorder %s17, 0
    %p225 = por %p223, %p224
    %p226 = scmp.ne.s32.totalorder %s212, %s213
    %p227 = scmp.eq.s32.totalorder %s18, 1
    %p228 = por %p226, %p227
    %p230 = scmp.ne.s32.totalorder %s213, %s229
    %p231 = scmp.eq.s32.totalorder %s18, 0
    %p232 = por %p230, %p231
    %p233 = scmp.le.s32.totalorder 1, %s12
    %p234 = scmp.lt.s32.totalorder %s12, 3
    %p235 = pnand %p233, %p234
    %p236 = pneg %p235
    // Predicated region
    $region9: #{downsample.1} parent=5 // pred_check
      _
    $region10: #{downsample.1} parent=5 // pred_check_branch
      %238 = sbr.rel (%p235) target = $region12
    $region11: #{downsample.1} parent=5 // pred_region
      %s239 = ssub.s32 %s12, 1
      // Predicated region
      $region13: #{downsample.1} parent=11 // pred_check
        %p240 = pneg %p169
      $region14: #{downsample.1} parent=11 // pred_check_branch
        %242 = sbr.rel (%p240) target = $region16
      $region15: #{downsample.1} parent=11 // pred_region
        %p243 = scmp.lt.s32.totalorder %s23, 0
        %s244 = scalar_select %p243, %s23, 0
        %s245 = smul.addr %s244, 4
        %s246 = scalar_lea.vmem %s4, %s245
      $region16: #{downsample.1} parent=11 // pred_fallthru
        _
      // Predicated region
      $region17: #{downsample.1} parent=11 // pred_check
        %p247 = pneg %p195
      $region18: #{downsample.1} parent=11 // pred_check_branch
        %249 = sbr.rel (%p247) target = $region20
      $region19: #{downsample.1} parent=11 // pred_region
        %p250 = scmp.lt.s32.totalorder %s23, 0
        %s251 = scalar_select %p250, %s23, 0
        %s252 = scalar_lea.vmem %s5, %s251
      $region20: #{downsample.1} parent=11 // pred_fallthru
        _
    $region12: #{downsample.1} parent=5 // pred_fallthru
      _
    %p253 = scmp.lt.s32.totalorder %s12, 2
    // Predicated region
    $region21: #{downsample.1} parent=5 // pred_check
      %p254 = pneg %p253
    $region22: #{downsample.1} parent=5 // pred_check_branch
      %256 = sbr.rel (%p254) target = $region24
    $region23: #{downsample.1} parent=5 // pred_region
      // Predicated region
      $region25: #{downsample.1} parent=23 // pred_check
        %p257 = pneg %p53
      $region26: #{downsample.1} parent=23 // pred_check_branch
        %259 = sbr.rel (%p257) target = $region28
      $region27: #{downsample.1} parent=23 // pred_region
        %s260 = sadd.s32 %s19, %s21
        %p261 = scmp.lt.s32.totalorder %s260, 1
        %s262 = scalar_select %p261, %s260, 1
        %s263 = smul.addr %s262, 18
        %s264 = smul.addr %s263, 8
        %s265 = scalar_lea.vmem %s0, %s264
        %s266 = sadd.s32 %s19, %s21
      $region28: #{downsample.1} parent=23 // pred_fallthru
        _
      // Predicated region
      $region29: #{downsample.1} parent=23 // pred_check
        %p267 = pneg %p81
      $region30: #{downsample.1} parent=23 // pred_check_branch
        %269 = sbr.rel (%p267) target = $region32
      $region31: #{downsample.1} parent=23 // pred_region
        %s270 = sadd.s32 %s19, %s21
        %p271 = scmp.lt.s32.totalorder %s270, 1
        %s272 = scalar_select %p271, %s270, 1
        %s273 = smul.addr %s272, 9
        %s274 = smul.addr %s273, 8
        %s275 = scalar_lea.vmem %s1, %s274
        %s276 = sadd.s32 %s19, %s21
      $region32: #{downsample.1} parent=23 // pred_fallthru
        _
      // Predicated region
      $region33: #{downsample.1} parent=23 // pred_check
        %p277 = pneg %p109
      $region34: #{downsample.1} parent=23 // pred_check_branch
        %279 = sbr.rel (%p277) target = $region36
      $region35: #{downsample.1} parent=23 // pred_region
        %s280 = smul.u32 8, %s21
        %p281 = scmp.lt.s32.totalorder %s19, 1
        %s282 = scalar_select %p281, %s19, 1
        %p283 = scmp.lt.s32.totalorder %s280, 7
        %s284 = scalar_select %p283, %s280, 7
        %s285 = smul.addr %s284, 2
        %s286 = smul.addr %s282, 16
        %s287 = sadd.s32 %s285, %s286
        %s288 = smul.addr %s287, 8
        %s289 = scalar_lea.vmem %s2, %s288
        %s290 = smul.u32 8, %s21
      $region36: #{downsample.1} parent=23 // pred_fallthru
        _
      // Predicated region
      $region37: #{downsample.1} parent=23 // pred_check
        %p291 = pneg %p137
      $region38: #{downsample.1} parent=23 // pred_check_branch
        %293 = sbr.rel (%p291) target = $region40
      $region39: #{downsample.1} parent=23 // pred_region
        %s294 = smul.u32 8, %s21
        %p295 = scmp.lt.s32.totalorder %s19, 1
        %s296 = scalar_select %p295, %s19, 1
        %p297 = scmp.lt.s32.totalorder %s294, 7
        %s298 = scalar_select %p297, %s294, 7
        %s299 = smul.addr %s296, 8
        %s300 = sadd.s32 %s298, %s299
        %s301 = smul.addr %s300, 8
        %s302 = scalar_lea.vmem %s3, %s301
        %s303 = smul.u32 8, %s21
      $region40: #{downsample.1} parent=23 // pred_fallthru
        _
    $region24: #{downsample.1} parent=5 // pred_fallthru
      _
    %p304 = scmp.le.s32.totalorder 1, %s12
    %p305 = scmp.lt.s32.totalorder %s12, 3
    %p306 = pnand %p304, %p305
    %p307 = pneg %p306
    // Predicated region
    $region41: #{downsample.1} parent=5 // pred_check
      _
    $region42: #{downsample.1} parent=5 // pred_check_branch
      %309 = sbr.rel (%p306) target = $region44
    $region43: #{downsample.1} parent=5 // pred_region
      %s310 = ssub.s32 %s12, 1
      %s311 = sadd.s32 %s22, %s24
      %p312 = scmp.lt.s32.totalorder %s311, 1
      %s313 = scalar_select %p312, %s311, 1
      %s314 = smul.addr %s313, 18
      %s315 = smul.addr %s314, 8
      %s316 = scalar_lea.vmem %s0, %s315
      %p317 = pneg %p59
      %p318 = pneg %p56
      %s319 = sadd.s32 %s22, %s24
      %p320 = scmp.lt.s32.totalorder %s319, 1
      %s321 = scalar_select %p320, %s319, 1
      %s322 = smul.addr %s321, 9
      %s323 = smul.addr %s322, 8
      %s324 = scalar_lea.vmem %s1, %s323
      %p325 = pneg %p87
      %p326 = pneg %p84
      %s327 = smul.u32 8, %s24
      %p328 = scmp.lt.s32.totalorder %s22, 1
      %s329 = scalar_select %p328, %s22, 1
      %p330 = scmp.lt.s32.totalorder %s327, 7
      %s331 = scalar_select %p330, %s327, 7
      %s332 = smul.addr %s331, 2
      %s333 = smul.addr %s329, 16
      %s334 = sadd.s32 %s332, %s333
      %s335 = smul.addr %s334, 8
      %s336 = scalar_lea.vmem %s2, %s335
      %p337 = pneg %p115
      %p338 = pneg %p112
      %s339 = smul.u32 8, %s24
      %p340 = scmp.lt.s32.totalorder %s22, 1
      %s341 = scalar_select %p340, %s22, 1
      %p342 = scmp.lt.s32.totalorder %s339, 7
      %s343 = scalar_select %p342, %s339, 7
      %s344 = smul.addr %s341, 8
      %s345 = sadd.s32 %s343, %s344
      %s346 = smul.addr %s345, 8
      %s347 = scalar_lea.vmem %s3, %s346
      %p348 = pneg %p143
      %p349 = pneg %p140
      %p350 = scmp.lt.s32.totalorder %s23, 0
      %s351 = scalar_select %p350, %s23, 0
      %s352 = smul.addr %s351, 4
      %s353 = scalar_lea.vmem %s4, %s352
      %p354 = pneg %p169
      %p355 = pneg %p166
      %p356 = scmp.lt.s32.totalorder %s23, 0
      %s357 = scalar_select %p356, %s23, 0
      %s358 = scalar_lea.vmem %s5, %s357
      %p359 = pneg %p195
      %p360 = pneg %p192
      %p361 = pneg %p225
      %p362 = pneg %p222
      %s363 = smul.u32 8, %s24
      %p364 = scmp.lt.s32.totalorder %s22, 1
      %s365 = scalar_select %p364, %s22, 1
      %p366 = scmp.lt.s32.totalorder %s363, 7
      %s367 = scalar_select %p366, %s363, 7
      %p368 = scmp.lt.s32.totalorder %s23, 0
      %s369 = scalar_select %p368, %s23, 0
      %s370 = sadd.s32 %s369, %s367
      %s371 = smul.addr %s365, 8
      %s372 = sadd.s32 %s370, %s371
      %s373 = smul.addr %s372, 8
      %s374 = scalar_lea.vmem %s6, %s373
      %s375 = sadd.s32 %s22, %s24
      %p376 = scmp.lt.s32.totalorder %s375, 1
      %s377 = scalar_select %p376, %s375, 1
      %s378 = smul.addr %s377, 18
      %s379 = smul.addr %s378, 8
      %s380 = scalar_lea.vmem %s0, %s379
      %s381 = sadd.s32 %s22, %s24
      %s382 = sadd.s32 %s22, %s24
      %p383 = scmp.lt.s32.totalorder %s382, 1
      %s384 = scalar_select %p383, %s382, 1
      %s385 = smul.addr %s384, 9
      %s386 = smul.addr %s385, 8
      %s387 = scalar_lea.vmem %s1, %s386
      %s388 = sadd.s32 %s22, %s24
      %s389 = smul.u32 8, %s24
      %p390 = scmp.lt.s32.totalorder %s22, 1
      %s391 = scalar_select %p390, %s22, 1
      %p392 = scmp.lt.s32.totalorder %s389, 7
      %s393 = scalar_select %p392, %s389, 7
      %s394 = smul.addr %s393, 2
      %s395 = smul.addr %s391, 16
      %s396 = sadd.s32 %s394, %s395
      %s397 = smul.addr %s396, 8
      %s398 = scalar_lea.vmem %s2, %s397
      %s399 = smul.u32 8, %s24
      %s400 = smul.u32 8, %s24
      %p401 = scmp.lt.s32.totalorder %s22, 1
      %s402 = scalar_select %p401, %s22, 1
      %p403 = scmp.lt.s32.totalorder %s400, 7
      %s404 = scalar_select %p403, %s400, 7
      %s405 = smul.addr %s402, 8
      %s406 = sadd.s32 %s404, %s405
      %s407 = smul.addr %s406, 8
      %s408 = scalar_lea.vmem %s3, %s407
      %s409 = smul.u32 8, %s24
      %p410 = scmp.lt.s32.totalorder %s23, 0
      %s411 = scalar_select %p410, %s23, 0
      %s412 = smul.addr %s411, 4
      %s413 = scalar_lea.vmem %s4, %s412
      %p414 = scmp.lt.s32.totalorder %s23, 0
      %s415 = scalar_select %p414, %s23, 0
      %s416 = scalar_lea.vmem %s5, %s415
      %s417 = smul.u32 8, %s24
      %p418 = scmp.lt.s32.totalorder %s22, 1
      %s419 = scalar_select %p418, %s22, 1
      %p420 = scmp.lt.s32.totalorder %s417, 7
      %s421 = scalar_select %p420, %s417, 7
      %p422 = scmp.lt.s32.totalorder %s23, 0
      %s423 = scalar_select %p422, %s23, 0
      %s424 = sadd.s32 %s423, %s421
      %s425 = smul.addr %s419, 8
      %s426 = sadd.s32 %s424, %s425
      %s427 = smul.addr %s426, 8
      %s428 = scalar_lea.vmem %s6, %s427
      %s429 = smul.u32 8, %s24
      %v430 = vld [vmem:[%s380] sm:$0xff]
      %v431 = vld [vmem:[%s380 + $0x8] sm:$0x1]
      %v432 = vld [vmem:[%s380 + $0x10] sm:$0xff]
      %v433 = vld [vmem:[%s380 + $0x18] sm:$0x1]
      %v434 = vld [vmem:[%s380 + $0x20] sm:$0xff]
      %v435 = vld [vmem:[%s380 + $0x28] sm:$0x1]
      %v436 = vld [vmem:[%s380 + $0x30] sm:$0xff]
      %v437 = vld [vmem:[%s380 + $0x38] sm:$0x1]
      %v438 = vld [vmem:[%s380 + $0x40] sm:$0xff]
      %v439 = vld [vmem:[%s380 + $0x48] sm:$0x1]
      %v440 = vld [vmem:[%s380 + $0x50] sm:$0xff]
      %v441 = vld [vmem:[%s380 + $0x58] sm:$0x1]
      %v442 = vld [vmem:[%s380 + $0x60] sm:$0xff]
      %v443 = vld [vmem:[%s380 + $0x68] sm:$0x1]
      %v444 = vld [vmem:[%s380 + $0x70] sm:$0xff]
      %v445 = vld [vmem:[%s380 + $0x78] sm:$0x1]
      %v446 = vld [vmem:[%s380 + $0x80] sm:$0xff]
      %v447 = vld [vmem:[%s380 + $0x88] sm:$0x1]
      %v448 = vld [vmem:[%s387] sm:$0xff]
      %v449 = vld [vmem:[%s387 + $0x8] sm:$0xff]
      %v450 = vld [vmem:[%s387 + $0x10] sm:$0xff]
      %v451 = vld [vmem:[%s387 + $0x18] sm:$0xff]
      %v452 = vld [vmem:[%s387 + $0x20] sm:$0xff]
      %v453 = vld [vmem:[%s387 + $0x28] sm:$0xff]
      %v454 = vld [vmem:[%s387 + $0x30] sm:$0xff]
      %v455 = vld [vmem:[%s387 + $0x38] sm:$0xff]
      %v456 = vld [vmem:[%s387 + $0x40] sm:$0xff]
      %v457 = vld [vmem:[%s398] sm:$0xff]
      %v458 = vld [vmem:[%s398 + $0x8] sm:$0x1]
      %v459 = vld [vmem:[%s398 + $0x10] sm:$0xff]
      %v460 = vld [vmem:[%s398 + $0x18] sm:$0x1]
      %v461 = vld [vmem:[%s398 + $0x20] sm:$0xff]
      %v462 = vld [vmem:[%s398 + $0x28] sm:$0x1]
      %v463 = vld [vmem:[%s398 + $0x30] sm:$0xff]
      %v464 = vld [vmem:[%s398 + $0x38] sm:$0x1]
      %v465 = vld [vmem:[%s398 + $0x40] sm:$0xff]
      %v466 = vld [vmem:[%s398 + $0x48] sm:$0x1]
      %v467 = vld [vmem:[%s398 + $0x50] sm:$0xff]
      %v468 = vld [vmem:[%s398 + $0x58] sm:$0x1]
      %v469 = vld [vmem:[%s398 + $0x60] sm:$0xff]
      %v470 = vld [vmem:[%s398 + $0x68] sm:$0x1]
      %v471 = vld [vmem:[%s398 + $0x70] sm:$0xff]
      %v472 = vld [vmem:[%s398 + $0x78] sm:$0x1]
      %v473 = vld [vmem:[%s408] sm:$0xff]
      %v474 = vld [vmem:[%s408 + $0x8] sm:$0xff]
      %v475 = vld [vmem:[%s408 + $0x10] sm:$0xff]
      %v476 = vld [vmem:[%s408 + $0x18] sm:$0xff]
      %v477 = vld [vmem:[%s408 + $0x20] sm:$0xff]
      %v478 = vld [vmem:[%s408 + $0x28] sm:$0xff]
      %v479 = vld [vmem:[%s408 + $0x30] sm:$0xff]
      %v480 = vld [vmem:[%s408 + $0x38] sm:$0xff]
      %v481 = vld [vmem:[%s413] sm:$0xf]
      %s482 = scalar_lea.vmem %s413, 4
      %v483 = vld [vmem:[%s482] sm:$0xf]
      %vm484 = vcmask 31744
      %v486 = vsel %vm484, %v448, 0
      %v489 = vsel %vm484, %v449, 0
      %v492 = vsel %vm484, %v450, 0
      %v495 = vsel %vm484, %v451, 0
      %v498 = vsel %vm484, %v452, 0
      %v501 = vsel %vm484, %v453, 0
      %v504 = vsel %vm484, %v454, 0
      %v507 = vsel %vm484, %v455, 0
      %vm509 = vcmask 1043456
      %v511 = vsel %vm509, %v483, 0
      %513 = vmatprep.subr.mxu0 0.0
      %514 = vmatpush1.msra.mxu0 0.0
      %515 = vmatprep.subr.mxu0 0.0
      %516 = vmatpush1.msra.mxu0 0.0
      %517 = vmatprep.subr.mxu0 0.0
      %518 = vmatpush1.msra.mxu0 0.0
      %519 = vmatprep.subr.mxu0 0.0
      %520 = vmatpush1.msra.mxu0 0.0
      %521 = vmatprep.subr.mxu0 0.0
      %522 = vmatpush1.msra.mxu0 0.0
      %523 = vmatprep.subr.mxu0 0.0
      %524 = vmatpush1.msra.mxu0 0.0
      %525 = vmatprep.subr.mxu0 0.0
      %526 = vmatpush1.msra.mxu0 0.0
      %527 = vmatprep.subr.mxu0 0.0
      %528 = vmatpush1.msra.mxu0 0.0
      %529 = vmatprep.subr.mxu0 0.0
      %530 = vmatpush1.msra.mxu0 0.0
      %531 = vmatprep.subr.mxu0 0.0
      %532 = vmatpush1.msra.mxu0 0.0
      %533 = vmatprep.subr.mxu0 0.0
      %534 = vmatpush1.msra.mxu0 0.0
      %535 = vmatprep.subr.mxu0 0.0
      %536 = vmatpush1.msra.mxu0 0.0
      %537 = vmatprep.subr.mxu0 0.0
      %538 = vmatpush1.msra.mxu0 0.0
      %539 = vmatprep.subr.mxu0 0.0
      %540 = vmatpush1.msra.mxu0 0.0
      %541 = vmatprep.subr.mxu0 0.0
      %542 = vmatpush1.msra.mxu0 0.0
      %543 = vmatprep.subr.mxu0 0.0
      %544 = vmatpush1.msra.mxu0 %v511
      %545 = vmatprep.subr.mxu0 0.0
      %546 = vmatpush2.msra.mxu0 0.0
      %547 = vmatprep.subr.mxu0 0.0
      %548 = vmatpush2.msra.mxu0 0.0
      %549 = vmatprep.subr.mxu0 0.0
      %550 = vmatpush2.msra.mxu0 0.0
      %551 = vmatprep.subr.mxu0 0.0
      %552 = vmatpush2.msra.mxu0 0.0
      %553 = vmatprep.subr.mxu0 0.0
      %554 = vmatpush2.msra.mxu0 0.0
      %555 = vmatprep.subr.mxu0 0.0
      %556 = vmatpush2.msra.mxu0 0.0
      %557 = vmatprep.subr.mxu0 0.0
      %558 = vmatpush2.msra.mxu0 0.0
      %559 = vmatprep.subr.mxu0 0.0
      %560 = vmatpush2.msra.mxu0 0.0
      %561 = vmatprep.subr.mxu0 0.0
      %562 = vmatpush2.msra.mxu0 0.0
      %563 = vmatprep.subr.mxu0 0.0
      %564 = vmatpush2.msra.mxu0 0.0
      %565 = vmatprep.subr.mxu0 0.0
      %566 = vmatpush2.msra.mxu0 0.0
      %567 = vmatprep.subr.mxu0 0.0
      %568 = vmatpush2.msra.mxu0 0.0
      %569 = vmatprep.subr.mxu0 0.0
      %570 = vmatpush2.msra.mxu0 0.0
      %571 = vmatprep.subr.mxu0 0.0
      %572 = vmatpush2.msra.mxu0 0.0
      %573 = vmatprep.subr.mxu0 0.0
      %574 = vmatpush2.msra.mxu0 0.0
      %575 = vmatprep.subr.mxu0 0.0
      %576 = vmatpush2.msra.mxu0 0.0
      %577 = vmatprep.mubr.f32.mxu0 0.0
      %578 = vmatmul.mubr.f32.gmra.mxu0 %v486
      %v579 = vpop.f32.mrf.mxu0
      %v580 = vadd.f32 0.0, %v579
      %v581 = vpop.f32.mrf.mxu0
      %582 = vmatprep.mubr.f32.mxu0 0.0
      %583 = vmatmul.mubr.f32.gmra.mxu0 %v489
      %v584 = vpop.f32.mrf.mxu0
      %v585 = vadd.f32 0.0, %v584
      %v586 = vpop.f32.mrf.mxu0
      %587 = vmatprep.mubr.f32.mxu0 0.0
      %588 = vmatmul.mubr.f32.gmra.mxu0 %v492
      %v589 = vpop.f32.mrf.mxu0
      %v590 = vadd.f32 0.0, %v589
      %v591 = vpop.f32.mrf.mxu0
      %592 = vmatprep.mubr.f32.mxu0 0.0
      %593 = vmatmul.mubr.f32.gmra.mxu0 %v495
      %v594 = vpop.f32.mrf.mxu0
      %v595 = vadd.f32 0.0, %v594
      %v596 = vpop.f32.mrf.mxu0
      %597 = vmatprep.mubr.f32.mxu0 0.0
      %598 = vmatmul.mubr.f32.gmra.mxu0 %v498
      %v599 = vpop.f32.mrf.mxu0
      %v600 = vadd.f32 0.0, %v599
      %v601 = vpop.f32.mrf.mxu0
      %602 = vmatprep.mubr.f32.mxu0 0.0
      %603 = vmatmul.mubr.f32.gmra.mxu0 %v501
      %v604 = vpop.f32.mrf.mxu0
      %v605 = vadd.f32 0.0, %v604
      %v606 = vpop.f32.mrf.mxu0
      %607 = vmatprep.mubr.f32.mxu0 0.0
      %608 = vmatmul.mubr.f32.gmra.mxu0 %v504
      %v609 = vpop.f32.mrf.mxu0
      %v610 = vadd.f32 0.0, %v609
      %v611 = vpop.f32.mrf.mxu0
      %612 = vmatprep.mubr.f32.mxu0 0.0
      %613 = vmatmul.mubr.f32.gmra.mxu0 %v507
      %v614 = vpop.f32.mrf.mxu0
      %v615 = vadd.f32 0.0, %v614
      %v616 = vpop.f32.mrf.mxu0
      %617 = vdwg.mxu0
      %v619 = vsel %vm484, %v430, 0
      %v622 = vsel %vm484, %v432, 0
      %v625 = vsel %vm484, %v434, 0
      %v628 = vsel %vm484, %v436, 0
      %v631 = vsel %vm484, %v438, 0
      %v634 = vsel %vm484, %v440, 0
      %v637 = vsel %vm484, %v442, 0
      %v640 = vsel %vm484, %v444, 0
      %v643 = vsel %vm509, %v481, 0
      %645 = vmatprep.subr.mxu0 0.0
      %646 = vmatpush1.msra.mxu0 0.0
      %647 = vmatprep.subr.mxu0 0.0
      %648 = vmatpush1.msra.mxu0 0.0
      %649 = vmatprep.subr.mxu0 0.0
      %650 = vmatpush1.msra.mxu0 0.0
      %651 = vmatprep.subr.mxu0 0.0
      %652 = vmatpush1.msra.mxu0 0.0
      %653 = vmatprep.subr.mxu0 0.0
      %654 = vmatpush1.msra.mxu0 0.0
      %655 = vmatprep.subr.mxu0 0.0
      %656 = vmatpush1.msra.mxu0 0.0
      %657 = vmatprep.subr.mxu0 0.0
      %658 = vmatpush1.msra.mxu0 0.0
      %659 = vmatprep.subr.mxu0 0.0
      %660 = vmatpush1.msra.mxu0 0.0
      %661 = vmatprep.subr.mxu0 0.0
      %662 = vmatpush1.msra.mxu0 0.0
      %663 = vmatprep.subr.mxu0 0.0
      %664 = vmatpush1.msra.mxu0 0.0
      %665 = vmatprep.subr.mxu0 0.0
      %666 = vmatpush1.msra.mxu0 0.0
      %667 = vmatprep.subr.mxu0 0.0
      %668 = vmatpush1.msra.mxu0 0.0
      %669 = vmatprep.subr.mxu0 0.0
      %670 = vmatpush1.msra.mxu0 0.0
      %671 = vmatprep.subr.mxu0 0.0
      %672 = vmatpush1.msra.mxu0 0.0
      %673 = vmatprep.subr.mxu0 0.0
      %674 = vmatpush1.msra.mxu0 0.0
      %675 = vmatprep.subr.mxu0 0.0
      %676 = vmatpush1.msra.mxu0 %v643
      %677 = vmatprep.subr.mxu0 0.0
      %678 = vmatpush2.msra.mxu0 0.0
      %679 = vmatprep.subr.mxu0 0.0
      %680 = vmatpush2.msra.mxu0 0.0
      %681 = vmatprep.subr.mxu0 0.0
      %682 = vmatpush2.msra.mxu0 0.0
      %683 = vmatprep.subr.mxu0 0.0
      %684 = vmatpush2.msra.mxu0 0.0
      %685 = vmatprep.subr.mxu0 0.0
      %686 = vmatpush2.msra.mxu0 0.0
      %687 = vmatprep.subr.mxu0 0.0
      %688 = vmatpush2.msra.mxu0 0.0
      %689 = vmatprep.subr.mxu0 0.0
      %690 = vmatpush2.msra.mxu0 0.0
      %691 = vmatprep.subr.mxu0 0.0
      %692 = vmatpush2.msra.mxu0 0.0
      %693 = vmatprep.subr.mxu0 0.0
      %694 = vmatpush2.msra.mxu0 0.0
      %695 = vmatprep.subr.mxu0 0.0
      %696 = vmatpush2.msra.mxu0 0.0
      %697 = vmatprep.subr.mxu0 0.0
      %698 = vmatpush2.msra.mxu0 0.0
      %699 = vmatprep.subr.mxu0 0.0
      %700 = vmatpush2.msra.mxu0 0.0
      %701 = vmatprep.subr.mxu0 0.0
      %702 = vmatpush2.msra.mxu0 0.0
      %703 = vmatprep.subr.mxu0 0.0
      %704 = vmatpush2.msra.mxu0 0.0
      %705 = vmatprep.subr.mxu0 0.0
      %706 = vmatpush2.msra.mxu0 0.0
      %707 = vmatprep.subr.mxu0 0.0
      %708 = vmatpush2.msra.mxu0 0.0
      %709 = vmatprep.mubr.f32.mxu0 0.0
      %710 = vmatmul.mubr.f32.gmra.mxu0 %v619
      %v711 = vpop.f32.mrf.mxu0
      %v712 = vadd.f32 %v580, %v711
      %v713 = vpop.f32.mrf.mxu0
      %714 = vmatprep.mubr.f32.mxu0 0.0
      %715 = vmatmul.mubr.f32.gmra.mxu0 %v622
      %v716 = vpop.f32.mrf.mxu0
      %v717 = vadd.f32 %v585, %v716
      %v718 = vpop.f32.mrf.mxu0
      %719 = vmatprep.mubr.f32.mxu0 0.0
      %720 = vmatmul.mubr.f32.gmra.mxu0 %v625
      %v721 = vpop.f32.mrf.mxu0
      %v722 = vadd.f32 %v590, %v721
      %v723 = vpop.f32.mrf.mxu0
      %724 = vmatprep.mubr.f32.mxu0 0.0
      %725 = vmatmul.mubr.f32.gmra.mxu0 %v628
      %v726 = vpop.f32.mrf.mxu0
      %v727 = vadd.f32 %v595, %v726
      %v728 = vpop.f32.mrf.mxu0
      %729 = vmatprep.mubr.f32.mxu0 0.0
      %730 = vmatmul.mubr.f32.gmra.mxu0 %v631
      %v731 = vpop.f32.mrf.mxu0
      %v732 = vadd.f32 %v600, %v731
      %v733 = vpop.f32.mrf.mxu0
      %734 = vmatprep.mubr.f32.mxu0 0.0
      %735 = vmatmul.mubr.f32.gmra.mxu0 %v634
      %v736 = vpop.f32.mrf.mxu0
      %v737 = vadd.f32 %v605, %v736
      %v738 = vpop.f32.mrf.mxu0
      %739 = vmatprep.mubr.f32.mxu0 0.0
      %740 = vmatmul.mubr.f32.gmra.mxu0 %v637
      %v741 = vpop.f32.mrf.mxu0
      %v742 = vadd.f32 %v610, %v741
      %v743 = vpop.f32.mrf.mxu0
      %744 = vmatprep.mubr.f32.mxu0 0.0
      %745 = vmatmul.mubr.f32.gmra.mxu0 %v640
      %v746 = vpop.f32.mrf.mxu0
      %v747 = vadd.f32 %v615, %v746
      %v748 = vpop.f32.mrf.mxu0
      %749 = vdwg.mxu0
      %vm758 = vcmask 1046528
      %v759 = vrot.slane %v430, 1
      %v760 = vrot.slane %v431, 1
      %v761 = vsel %vm758, %v759, %v760
      %v762 = vrot.slane %v432, 1
      %v763 = vrot.slane %v433, 1
      %v764 = vsel %vm758, %v762, %v763
      %v765 = vrot.slane %v434, 1
      %v766 = vrot.slane %v435, 1
      %v767 = vsel %vm758, %v765, %v766
      %v768 = vrot.slane %v436, 1
      %v769 = vrot.slane %v437, 1
      %v770 = vsel %vm758, %v768, %v769
      %v771 = vrot.slane %v438, 1
      %v772 = vrot.slane %v439, 1
      %v773 = vsel %vm758, %v771, %v772
      %v774 = vrot.slane %v440, 1
      %v775 = vrot.slane %v441, 1
      %v776 = vsel %vm758, %v774, %v775
      %v777 = vrot.slane %v442, 1
      %v778 = vrot.slane %v443, 1
      %v779 = vsel %vm758, %v777, %v778
      %v780 = vrot.slane %v444, 1
      %v781 = vrot.slane %v445, 1
      %v782 = vsel %vm758, %v780, %v781
      %s783 = scalar_lea.vmem %s413, 8
      %v784 = vld [vmem:[%s783] sm:$0xf]
      %v785 = vsel %vm484, %v761, 0
      %v787 = vsel %vm484, %v764, 0
      %v789 = vsel %vm484, %v767, 0
      %v791 = vsel %vm484, %v770, 0
      %v793 = vsel %vm484, %v773, 0
      %v795 = vsel %vm484, %v776, 0
      %v797 = vsel %vm484, %v779, 0
      %v799 = vsel %vm484, %v782, 0
      %v802 = vsel %vm509, %v784, 0
      %804 = vmatprep.subr.mxu0 0.0
      %805 = vmatpush1.msra.mxu0 0.0
      %806 = vmatprep.subr.mxu0 0.0
      %807 = vmatpush1.msra.mxu0 0.0
      %808 = vmatprep.subr.mxu0 0.0
      %809 = vmatpush1.msra.mxu0 0.0
      %810 = vmatprep.subr.mxu0 0.0
      %811 = vmatpush1.msra.mxu0 0.0
      %812 = vmatprep.subr.mxu0 0.0
      %813 = vmatpush1.msra.mxu0 0.0
      %814 = vmatprep.subr.mxu0 0.0
      %815 = vmatpush1.msra.mxu0 0.0
      %816 = vmatprep.subr.mxu0 0.0
      %817 = vmatpush1.msra.mxu0 0.0
      %818 = vmatprep.subr.mxu0 0.0
      %819 = vmatpush1.msra.mxu0 0.0
      %820 = vmatprep.subr.mxu0 0.0
      %821 = vmatpush1.msra.mxu0 0.0
      %822 = vmatprep.subr.mxu0 0.0
      %823 = vmatpush1.msra.mxu0 0.0
      %824 = vmatprep.subr.mxu0 0.0
      %825 = vmatpush1.msra.mxu0 0.0
      %826 = vmatprep.subr.mxu0 0.0
      %827 = vmatpush1.msra.mxu0 0.0
      %828 = vmatprep.subr.mxu0 0.0
      %829 = vmatpush1.msra.mxu0 0.0
      %830 = vmatprep.subr.mxu0 0.0
      %831 = vmatpush1.msra.mxu0 0.0
      %832 = vmatprep.subr.mxu0 0.0
      %833 = vmatpush1.msra.mxu0 0.0
      %834 = vmatprep.subr.mxu0 0.0
      %835 = vmatpush1.msra.mxu0 %v802
      %836 = vmatprep.subr.mxu0 0.0
      %837 = vmatpush2.msra.mxu0 0.0
      %838 = vmatprep.subr.mxu0 0.0
      %839 = vmatpush2.msra.mxu0 0.0
      %840 = vmatprep.subr.mxu0 0.0
      %841 = vmatpush2.msra.mxu0 0.0
      %842 = vmatprep.subr.mxu0 0.0
      %843 = vmatpush2.msra.mxu0 0.0
      %844 = vmatprep.subr.mxu0 0.0
      %845 = vmatpush2.msra.mxu0 0.0
      %846 = vmatprep.subr.mxu0 0.0
      %847 = vmatpush2.msra.mxu0 0.0
      %848 = vmatprep.subr.mxu0 0.0
      %849 = vmatpush2.msra.mxu0 0.0
      %850 = vmatprep.subr.mxu0 0.0
      %851 = vmatpush2.msra.mxu0 0.0
      %852 = vmatprep.subr.mxu0 0.0
      %853 = vmatpush2.msra.mxu0 0.0
      %854 = vmatprep.subr.mxu0 0.0
      %855 = vmatpush2.msra.mxu0 0.0
      %856 = vmatprep.subr.mxu0 0.0
      %857 = vmatpush2.msra.mxu0 0.0
      %858 = vmatprep.subr.mxu0 0.0
      %859 = vmatpush2.msra.mxu0 0.0
      %860 = vmatprep.subr.mxu0 0.0
      %861 = vmatpush2.msra.mxu0 0.0
      %862 = vmatprep.subr.mxu0 0.0
      %863 = vmatpush2.msra.mxu0 0.0
      %864 = vmatprep.subr.mxu0 0.0
      %865 = vmatpush2.msra.mxu0 0.0
      %866 = vmatprep.subr.mxu0 0.0
      %867 = vmatpush2.msra.mxu0 0.0
      %868 = vmatprep.mubr.f32.mxu0 0.0
      %869 = vmatmul.mubr.f32.gmra.mxu0 %v785
      %v870 = vpop.f32.mrf.mxu0
      %v871 = vadd.f32 0.0, %v870
      %v872 = vpop.f32.mrf.mxu0
      %873 = vmatprep.mubr.f32.mxu0 0.0
      %874 = vmatmul.mubr.f32.gmra.mxu0 %v787
      %v875 = vpop.f32.mrf.mxu0
      %v876 = vadd.f32 0.0, %v875
      %v877 = vpop.f32.mrf.mxu0
      %878 = vmatprep.mubr.f32.mxu0 0.0
      %879 = vmatmul.mubr.f32.gmra.mxu0 %v789
      %v880 = vpop.f32.mrf.mxu0
      %v881 = vadd.f32 0.0, %v880
      %v882 = vpop.f32.mrf.mxu0
      %883 = vmatprep.mubr.f32.mxu0 0.0
      %884 = vmatmul.mubr.f32.gmra.mxu0 %v791
      %v885 = vpop.f32.mrf.mxu0
      %v886 = vadd.f32 0.0, %v885
      %v887 = vpop.f32.mrf.mxu0
      %888 = vmatprep.mubr.f32.mxu0 0.0
      %889 = vmatmul.mubr.f32.gmra.mxu0 %v793
      %v890 = vpop.f32.mrf.mxu0
      %v891 = vadd.f32 0.0, %v890
      %v892 = vpop.f32.mrf.mxu0
      %893 = vmatprep.mubr.f32.mxu0 0.0
      %894 = vmatmul.mubr.f32.gmra.mxu0 %v795
      %v895 = vpop.f32.mrf.mxu0
      %v896 = vadd.f32 0.0, %v895
      %v897 = vpop.f32.mrf.mxu0
      %898 = vmatprep.mubr.f32.mxu0 0.0
      %899 = vmatmul.mubr.f32.gmra.mxu0 %v797
      %v900 = vpop.f32.mrf.mxu0
      %v901 = vadd.f32 0.0, %v900
      %v902 = vpop.f32.mrf.mxu0
      %903 = vmatprep.mubr.f32.mxu0 0.0
      %904 = vmatmul.mubr.f32.gmra.mxu0 %v799
      %v905 = vpop.f32.mrf.mxu0
      %v906 = vadd.f32 0.0, %v905
      %v907 = vpop.f32.mrf.mxu0
      %908 = vdwg.mxu0
      %v909 = vadd.f32 %v712, %v871
      %v910 = vadd.f32 %v717, %v876
      %v911 = vadd.f32 %v722, %v881
      %v912 = vadd.f32 %v727, %v886
      %v913 = vadd.f32 %v732, %v891
      %v914 = vadd.f32 %v737, %v896
      %v915 = vadd.f32 %v742, %v901
      %v916 = vadd.f32 %v747, %v906
      %s917 = scalar_lea.vmem %s413, 12
      %v918 = vld [vmem:[%s917] sm:$0xf]
      %v920 = vsel %vm484, %v457, 0
      %v923 = vsel %vm484, %v459, 0
      %v926 = vsel %vm484, %v461, 0
      %v929 = vsel %vm484, %v463, 0
      %v932 = vsel %vm484, %v465, 0
      %v935 = vsel %vm484, %v467, 0
      %v938 = vsel %vm484, %v469, 0
      %v941 = vsel %vm484, %v471, 0
      %v944 = vsel %vm509, %v918, 0
      %946 = vmatprep.subr.mxu0 0.0
      %947 = vmatpush1.msra.mxu0 0.0
      %948 = vmatprep.subr.mxu0 0.0
      %949 = vmatpush1.msra.mxu0 0.0
      %950 = vmatprep.subr.mxu0 0.0
      %951 = vmatpush1.msra.mxu0 0.0
      %952 = vmatprep.subr.mxu0 0.0
      %953 = vmatpush1.msra.mxu0 0.0
      %954 = vmatprep.subr.mxu0 0.0
      %955 = vmatpush1.msra.mxu0 0.0
      %956 = vmatprep.subr.mxu0 0.0
      %957 = vmatpush1.msra.mxu0 0.0
      %958 = vmatprep.subr.mxu0 0.0
      %959 = vmatpush1.msra.mxu0 0.0
      %960 = vmatprep.subr.mxu0 0.0
      %961 = vmatpush1.msra.mxu0 0.0
      %962 = vmatprep.subr.mxu0 0.0
      %963 = vmatpush1.msra.mxu0 0.0
      %964 = vmatprep.subr.mxu0 0.0
      %965 = vmatpush1.msra.mxu0 0.0
      %966 = vmatprep.subr.mxu0 0.0
      %967 = vmatpush1.msra.mxu0 0.0
      %968 = vmatprep.subr.mxu0 0.0
      %969 = vmatpush1.msra.mxu0 0.0
      %970 = vmatprep.subr.mxu0 0.0
      %971 = vmatpush1.msra.mxu0 0.0
      %972 = vmatprep.subr.mxu0 0.0
      %973 = vmatpush1.msra.mxu0 0.0
      %974 = vmatprep.subr.mxu0 0.0
      %975 = vmatpush1.msra.mxu0 0.0
      %976 = vmatprep.subr.mxu0 0.0
      %977 = vmatpush1.msra.mxu0 %v944
      %978 = vmatprep.subr.mxu0 0.0
      %979 = vmatpush2.msra.mxu0 0.0
      %980 = vmatprep.subr.mxu0 0.0
      %981 = vmatpush2.msra.mxu0 0.0
      %982 = vmatprep.subr.mxu0 0.0
      %983 = vmatpush2.msra.mxu0 0.0
      %984 = vmatprep.subr.mxu0 0.0
      %985 = vmatpush2.msra.mxu0 0.0
      %986 = vmatprep.subr.mxu0 0.0
      %987 = vmatpush2.msra.mxu0 0.0
      %988 = vmatprep.subr.mxu0 0.0
      %989 = vmatpush2.msra.mxu0 0.0
      %990 = vmatprep.subr.mxu0 0.0
      %991 = vmatpush2.msra.mxu0 0.0
      %992 = vmatprep.subr.mxu0 0.0
      %993 = vmatpush2.msra.mxu0 0.0
      %994 = vmatprep.subr.mxu0 0.0
      %995 = vmatpush2.msra.mxu0 0.0
      %996 = vmatprep.subr.mxu0 0.0
      %997 = vmatpush2.msra.mxu0 0.0
      %998 = vmatprep.subr.mxu0 0.0
      %999 = vmatpush2.msra.mxu0 0.0
      %1000 = vmatprep.subr.mxu0 0.0
      %1001 = vmatpush2.msra.mxu0 0.0
      %1002 = vmatprep.subr.mxu0 0.0
      %1003 = vmatpush2.msra.mxu0 0.0
      %1004 = vmatprep.subr.mxu0 0.0
      %1005 = vmatpush2.msra.mxu0 0.0
      %1006 = vmatprep.subr.mxu0 0.0
      %1007 = vmatpush2.msra.mxu0 0.0
      %1008 = vmatprep.subr.mxu0 0.0
      %1009 = vmatpush2.msra.mxu0 0.0
      %1010 = vmatprep.mubr.f32.mxu0 0.0
      %1011 = vmatmul.mubr.f32.gmra.mxu0 %v920
      %v1012 = vpop.f32.mrf.mxu0
      %v1013 = vadd.f32 0.0, %v1012
      %v1014 = vpop.f32.mrf.mxu0
      %1015 = vmatprep.mubr.f32.mxu0 0.0
      %1016 = vmatmul.mubr.f32.gmra.mxu0 %v923
      %v1017 = vpop.f32.mrf.mxu0
      %v1018 = vadd.f32 0.0, %v1017
      %v1019 = vpop.f32.mrf.mxu0
      %1020 = vmatprep.mubr.f32.mxu0 0.0
      %1021 = vmatmul.mubr.f32.gmra.mxu0 %v926
      %v1022 = vpop.f32.mrf.mxu0
      %v1023 = vadd.f32 0.0, %v1022
      %v1024 = vpop.f32.mrf.mxu0
      %1025 = vmatprep.mubr.f32.mxu0 0.0
      %1026 = vmatmul.mubr.f32.gmra.mxu0 %v929
      %v1027 = vpop.f32.mrf.mxu0
      %v1028 = vadd.f32 0.0, %v1027
      %v1029 = vpop.f32.mrf.mxu0
      %1030 = vmatprep.mubr.f32.mxu0 0.0
      %1031 = vmatmul.mubr.f32.gmra.mxu0 %v932
      %v1032 = vpop.f32.mrf.mxu0
      %v1033 = vadd.f32 0.0, %v1032
      %v1034 = vpop.f32.mrf.mxu0
      %1035 = vmatprep.mubr.f32.mxu0 0.0
      %1036 = vmatmul.mubr.f32.gmra.mxu0 %v935
      %v1037 = vpop.f32.mrf.mxu0
      %v1038 = vadd.f32 0.0, %v1037
      %v1039 = vpop.f32.mrf.mxu0
      %1040 = vmatprep.mubr.f32.mxu0 0.0
      %1041 = vmatmul.mubr.f32.gmra.mxu0 %v938
      %v1042 = vpop.f32.mrf.mxu0
      %v1043 = vadd.f32 0.0, %v1042
      %v1044 = vpop.f32.mrf.mxu0
      %1045 = vmatprep.mubr.f32.mxu0 0.0
      %1046 = vmatmul.mubr.f32.gmra.mxu0 %v941
      %v1047 = vpop.f32.mrf.mxu0
      %v1048 = vadd.f32 0.0, %v1047
      %v1049 = vpop.f32.mrf.mxu0
      %1050 = vdwg.mxu0
      %v1051 = vadd.f32 %v909, %v1013
      %v1052 = vadd.f32 %v910, %v1018
      %v1053 = vadd.f32 %v911, %v1023
      %v1054 = vadd.f32 %v912, %v1028
      %v1055 = vadd.f32 %v913, %v1033
      %v1056 = vadd.f32 %v914, %v1038
      %v1057 = vadd.f32 %v915, %v1043
      %v1058 = vadd.f32 %v916, %v1048
      %s1059 = scalar_lea.vmem %s413, 16
      %v1060 = vld [vmem:[%s1059] sm:$0xf]
      %v1062 = vsel %vm484, %v473, 0
      %v1065 = vsel %vm484, %v474, 0
      %v1068 = vsel %vm484, %v475, 0
      %v1071 = vsel %vm484, %v476, 0
      %v1074 = vsel %vm484, %v477, 0
      %v1077 = vsel %vm484, %v478, 0
      %v1080 = vsel %vm484, %v479, 0
      %v1083 = vsel %vm484, %v480, 0
      %v1086 = vsel %vm509, %v1060, 0
      %1088 = vmatprep.subr.mxu0 0.0
      %1089 = vmatpush1.msra.mxu0 0.0
      %1090 = vmatprep.subr.mxu0 0.0
      %1091 = vmatpush1.msra.mxu0 0.0
      %1092 = vmatprep.subr.mxu0 0.0
      %1093 = vmatpush1.msra.mxu0 0.0
      %1094 = vmatprep.subr.mxu0 0.0
      %1095 = vmatpush1.msra.mxu0 0.0
      %1096 = vmatprep.subr.mxu0 0.0
      %1097 = vmatpush1.msra.mxu0 0.0
      %1098 = vmatprep.subr.mxu0 0.0
      %1099 = vmatpush1.msra.mxu0 0.0
      %1100 = vmatprep.subr.mxu0 0.0
      %1101 = vmatpush1.msra.mxu0 0.0
      %1102 = vmatprep.subr.mxu0 0.0
      %1103 = vmatpush1.msra.mxu0 0.0
      %1104 = vmatprep.subr.mxu0 0.0
      %1105 = vmatpush1.msra.mxu0 0.0
      %1106 = vmatprep.subr.mxu0 0.0
      %1107 = vmatpush1.msra.mxu0 0.0
      %1108 = vmatprep.subr.mxu0 0.0
      %1109 = vmatpush1.msra.mxu0 0.0
      %1110 = vmatprep.subr.mxu0 0.0
      %1111 = vmatpush1.msra.mxu0 0.0
      %1112 = vmatprep.subr.mxu0 0.0
      %1113 = vmatpush1.msra.mxu0 0.0
      %1114 = vmatprep.subr.mxu0 0.0
      %1115 = vmatpush1.msra.mxu0 0.0
      %1116 = vmatprep.subr.mxu0 0.0
      %1117 = vmatpush1.msra.mxu0 0.0
      %1118 = vmatprep.subr.mxu0 0.0
      %1119 = vmatpush1.msra.mxu0 %v1086
      %1120 = vmatprep.subr.mxu0 0.0
      %1121 = vmatpush2.msra.mxu0 0.0
      %1122 = vmatprep.subr.mxu0 0.0
      %1123 = vmatpush2.msra.mxu0 0.0
      %1124 = vmatprep.subr.mxu0 0.0
      %1125 = vmatpush2.msra.mxu0 0.0
      %1126 = vmatprep.subr.mxu0 0.0
      %1127 = vmatpush2.msra.mxu0 0.0
      %1128 = vmatprep.subr.mxu0 0.0
      %1129 = vmatpush2.msra.mxu0 0.0
      %1130 = vmatprep.subr.mxu0 0.0
      %1131 = vmatpush2.msra.mxu0 0.0
      %1132 = vmatprep.subr.mxu0 0.0
      %1133 = vmatpush2.msra.mxu0 0.0
      %1134 = vmatprep.subr.mxu0 0.0
      %1135 = vmatpush2.msra.mxu0 0.0
      %1136 = vmatprep.subr.mxu0 0.0
      %1137 = vmatpush2.msra.mxu0 0.0
      %1138 = vmatprep.subr.mxu0 0.0
      %1139 = vmatpush2.msra.mxu0 0.0
      %1140 = vmatprep.subr.mxu0 0.0
      %1141 = vmatpush2.msra.mxu0 0.0
      %1142 = vmatprep.subr.mxu0 0.0
      %1143 = vmatpush2.msra.mxu0 0.0
      %1144 = vmatprep.subr.mxu0 0.0
      %1145 = vmatpush2.msra.mxu0 0.0
      %1146 = vmatprep.subr.mxu0 0.0
      %1147 = vmatpush2.msra.mxu0 0.0
      %1148 = vmatprep.subr.mxu0 0.0
      %1149 = vmatpush2.msra.mxu0 0.0
      %1150 = vmatprep.subr.mxu0 0.0
      %1151 = vmatpush2.msra.mxu0 0.0
      %1152 = vmatprep.mubr.f32.mxu0 0.0
      %1153 = vmatmul.mubr.f32.gmra.mxu0 %v1062
      %v1154 = vpop.f32.mrf.mxu0
      %v1155 = vadd.f32 0.0, %v1154
      %v1156 = vpop.f32.mrf.mxu0
      %1157 = vmatprep.mubr.f32.mxu0 0.0
      %1158 = vmatmul.mubr.f32.gmra.mxu0 %v1065
      %v1159 = vpop.f32.mrf.mxu0
      %v1160 = vadd.f32 0.0, %v1159
      %v1161 = vpop.f32.mrf.mxu0
      %1162 = vmatprep.mubr.f32.mxu0 0.0
      %1163 = vmatmul.mubr.f32.gmra.mxu0 %v1068
      %v1164 = vpop.f32.mrf.mxu0
      %v1165 = vadd.f32 0.0, %v1164
      %v1166 = vpop.f32.mrf.mxu0
      %1167 = vmatprep.mubr.f32.mxu0 0.0
      %1168 = vmatmul.mubr.f32.gmra.mxu0 %v1071
      %v1169 = vpop.f32.mrf.mxu0
      %v1170 = vadd.f32 0.0, %v1169
      %v1171 = vpop.f32.mrf.mxu0
      %1172 = vmatprep.mubr.f32.mxu0 0.0
      %1173 = vmatmul.mubr.f32.gmra.mxu0 %v1074
      %v1174 = vpop.f32.mrf.mxu0
      %v1175 = vadd.f32 0.0, %v1174
      %v1176 = vpop.f32.mrf.mxu0
      %1177 = vmatprep.mubr.f32.mxu0 0.0
      %1178 = vmatmul.mubr.f32.gmra.mxu0 %v1077
      %v1179 = vpop.f32.mrf.mxu0
      %v1180 = vadd.f32 0.0, %v1179
      %v1181 = vpop.f32.mrf.mxu0
      %1182 = vmatprep.mubr.f32.mxu0 0.0
      %1183 = vmatmul.mubr.f32.gmra.mxu0 %v1080
      %v1184 = vpop.f32.mrf.mxu0
      %v1185 = vadd.f32 0.0, %v1184
      %v1186 = vpop.f32.mrf.mxu0
      %1187 = vmatprep.mubr.f32.mxu0 0.0
      %1188 = vmatmul.mubr.f32.gmra.mxu0 %v1083
      %v1189 = vpop.f32.mrf.mxu0
      %v1190 = vadd.f32 0.0, %v1189
      %v1191 = vpop.f32.mrf.mxu0
      %1192 = vdwg.mxu0
      %v1193 = vadd.f32 %v1051, %v1155
      %v1194 = vadd.f32 %v1052, %v1160
      %v1195 = vadd.f32 %v1053, %v1165
      %v1196 = vadd.f32 %v1054, %v1170
      %v1197 = vadd.f32 %v1055, %v1175
      %v1198 = vadd.f32 %v1056, %v1180
      %v1199 = vadd.f32 %v1057, %v1185
      %v1200 = vadd.f32 %v1058, %v1190
      %v1209 = vrot.slane %v457, 1
      %v1210 = vrot.slane %v458, 1
      %v1211 = vsel %vm758, %v1209, %v1210
      %v1212 = vrot.slane %v459, 1
      %v1213 = vrot.slane %v460, 1
      %v1214 = vsel %vm758, %v1212, %v1213
      %v1215 = vrot.slane %v461, 1
      %v1216 = vrot.slane %v462, 1
      %v1217 = vsel %vm758, %v1215, %v1216
      %v1218 = vrot.slane %v463, 1
      %v1219 = vrot.slane %v464, 1
      %v1220 = vsel %vm758, %v1218, %v1219
      %v1221 = vrot.slane %v465, 1
      %v1222 = vrot.slane %v466, 1
      %v1223 = vsel %vm758, %v1221, %v1222
      %v1224 = vrot.slane %v467, 1
      %v1225 = vrot.slane %v468, 1
      %v1226 = vsel %vm758, %v1224, %v1225
      %v1227 = vrot.slane %v469, 1
      %v1228 = vrot.slane %v470, 1
      %v1229 = vsel %vm758, %v1227, %v1228
      %v1230 = vrot.slane %v471, 1
      %v1231 = vrot.slane %v472, 1
      %v1232 = vsel %vm758, %v1230, %v1231
      %s1233 = scalar_lea.vmem %s413, 20
      %v1234 = vld [vmem:[%s1233] sm:$0xf]
      %v1235 = vsel %vm484, %v1211, 0
      %v1237 = vsel %vm484, %v1214, 0
      %v1239 = vsel %vm484, %v1217, 0
      %v1241 = vsel %vm484, %v1220, 0
      %v1243 = vsel %vm484, %v1223, 0
      %v1245 = vsel %vm484, %v1226, 0
      %v1247 = vsel %vm484, %v1229, 0
      %v1249 = vsel %vm484, %v1232, 0
      %v1252 = vsel %vm509, %v1234, 0
      %1254 = vmatprep.subr.mxu0 0.0
      %1255 = vmatpush1.msra.mxu0 0.0
      %1256 = vmatprep.subr.mxu0 0.0
      %1257 = vmatpush1.msra.mxu0 0.0
      %1258 = vmatprep.subr.mxu0 0.0
      %1259 = vmatpush1.msra.mxu0 0.0
      %1260 = vmatprep.subr.mxu0 0.0
      %1261 = vmatpush1.msra.mxu0 0.0
      %1262 = vmatprep.subr.mxu0 0.0
      %1263 = vmatpush1.msra.mxu0 0.0
      %1264 = vmatprep.subr.mxu0 0.0
      %1265 = vmatpush1.msra.mxu0 0.0
      %1266 = vmatprep.subr.mxu0 0.0
      %1267 = vmatpush1.msra.mxu0 0.0
      %1268 = vmatprep.subr.mxu0 0.0
      %1269 = vmatpush1.msra.mxu0 0.0
      %1270 = vmatprep.subr.mxu0 0.0
      %1271 = vmatpush1.msra.mxu0 0.0
      %1272 = vmatprep.subr.mxu0 0.0
      %1273 = vmatpush1.msra.mxu0 0.0
      %1274 = vmatprep.subr.mxu0 0.0
      %1275 = vmatpush1.msra.mxu0 0.0
      %1276 = vmatprep.subr.mxu0 0.0
      %1277 = vmatpush1.msra.mxu0 0.0
      %1278 = vmatprep.subr.mxu0 0.0
      %1279 = vmatpush1.msra.mxu0 0.0
      %1280 = vmatprep.subr.mxu0 0.0
      %1281 = vmatpush1.msra.mxu0 0.0
      %1282 = vmatprep.subr.mxu0 0.0
      %1283 = vmatpush1.msra.mxu0 0.0
      %1284 = vmatprep.subr.mxu0 0.0
      %1285 = vmatpush1.msra.mxu0 %v1252
      %1286 = vmatprep.subr.mxu0 0.0
      %1287 = vmatpush2.msra.mxu0 0.0
      %1288 = vmatprep.subr.mxu0 0.0
      %1289 = vmatpush2.msra.mxu0 0.0
      %1290 = vmatprep.subr.mxu0 0.0
      %1291 = vmatpush2.msra.mxu0 0.0
      %1292 = vmatprep.subr.mxu0 0.0
      %1293 = vmatpush2.msra.mxu0 0.0
      %1294 = vmatprep.subr.mxu0 0.0
      %1295 = vmatpush2.msra.mxu0 0.0
      %1296 = vmatprep.subr.mxu0 0.0
      %1297 = vmatpush2.msra.mxu0 0.0
      %1298 = vmatprep.subr.mxu0 0.0
      %1299 = vmatpush2.msra.mxu0 0.0
      %1300 = vmatprep.subr.mxu0 0.0
      %1301 = vmatpush2.msra.mxu0 0.0
      %1302 = vmatprep.subr.mxu0 0.0
      %1303 = vmatpush2.msra.mxu0 0.0
      %1304 = vmatprep.subr.mxu0 0.0
      %1305 = vmatpush2.msra.mxu0 0.0
      %1306 = vmatprep.subr.mxu0 0.0
      %1307 = vmatpush2.msra.mxu0 0.0
      %1308 = vmatprep.subr.mxu0 0.0
      %1309 = vmatpush2.msra.mxu0 0.0
      %1310 = vmatprep.subr.mxu0 0.0
      %1311 = vmatpush2.msra.mxu0 0.0
      %1312 = vmatprep.subr.mxu0 0.0
      %1313 = vmatpush2.msra.mxu0 0.0
      %1314 = vmatprep.subr.mxu0 0.0
      %1315 = vmatpush2.msra.mxu0 0.0
      %1316 = vmatprep.subr.mxu0 0.0
      %1317 = vmatpush2.msra.mxu0 0.0
      %1318 = vmatprep.mubr.f32.mxu0 0.0
      %1319 = vmatmul.mubr.f32.gmra.mxu0 %v1235
      %v1320 = vpop.f32.mrf.mxu0
      %v1321 = vadd.f32 0.0, %v1320
      %v1322 = vpop.f32.mrf.mxu0
      %1323 = vmatprep.mubr.f32.mxu0 0.0
      %1324 = vmatmul.mubr.f32.gmra.mxu0 %v1237
      %v1325 = vpop.f32.mrf.mxu0
      %v1326 = vadd.f32 0.0, %v1325
      %v1327 = vpop.f32.mrf.mxu0
      %1328 = vmatprep.mubr.f32.mxu0 0.0
      %1329 = vmatmul.mubr.f32.gmra.mxu0 %v1239
      %v1330 = vpop.f32.mrf.mxu0
      %v1331 = vadd.f32 0.0, %v1330
      %v1332 = vpop.f32.mrf.mxu0
      %1333 = vmatprep.mubr.f32.mxu0 0.0
      %1334 = vmatmul.mubr.f32.gmra.mxu0 %v1241
      %v1335 = vpop.f32.mrf.mxu0
      %v1336 = vadd.f32 0.0, %v1335
      %v1337 = vpop.f32.mrf.mxu0
      %1338 = vmatprep.mubr.f32.mxu0 0.0
      %1339 = vmatmul.mubr.f32.gmra.mxu0 %v1243
      %v1340 = vpop.f32.mrf.mxu0
      %v1341 = vadd.f32 0.0, %v1340
      %v1342 = vpop.f32.mrf.mxu0
      %1343 = vmatprep.mubr.f32.mxu0 0.0
      %1344 = vmatmul.mubr.f32.gmra.mxu0 %v1245
      %v1345 = vpop.f32.mrf.mxu0
      %v1346 = vadd.f32 0.0, %v1345
      %v1347 = vpop.f32.mrf.mxu0
      %1348 = vmatprep.mubr.f32.mxu0 0.0
      %1349 = vmatmul.mubr.f32.gmra.mxu0 %v1247
      %v1350 = vpop.f32.mrf.mxu0
      %v1351 = vadd.f32 0.0, %v1350
      %v1352 = vpop.f32.mrf.mxu0
      %1353 = vmatprep.mubr.f32.mxu0 0.0
      %1354 = vmatmul.mubr.f32.gmra.mxu0 %v1249
      %v1355 = vpop.f32.mrf.mxu0
      %v1356 = vadd.f32 0.0, %v1355
      %v1357 = vpop.f32.mrf.mxu0
      %1358 = vdwg.mxu0
      %v1359 = vadd.f32 %v1193, %v1321
      %v1360 = vadd.f32 %v1194, %v1326
      %v1361 = vadd.f32 %v1195, %v1331
      %v1362 = vadd.f32 %v1196, %v1336
      %v1363 = vadd.f32 %v1197, %v1341
      %v1364 = vadd.f32 %v1198, %v1346
      %v1365 = vadd.f32 %v1199, %v1351
      %v1366 = vadd.f32 %v1200, %v1356
      %s1367 = scalar_lea.vmem %s413, 24
      %v1368 = vld [vmem:[%s1367] sm:$0xf]
      %v1370 = vsel %vm484, %v446, 0
      %v1373 = vsel %vm509, %v1368, 0
      %1375 = vmatprep.subr.mxu0 0.0
      %1376 = vmatpush1.msra.mxu0 0.0
      %1377 = vmatprep.subr.mxu0 0.0
      %1378 = vmatpush1.msra.mxu0 0.0
      %1379 = vmatprep.subr.mxu0 0.0
      %1380 = vmatpush1.msra.mxu0 0.0
      %1381 = vmatprep.subr.mxu0 0.0
      %1382 = vmatpush1.msra.mxu0 0.0
      %1383 = vmatprep.subr.mxu0 0.0
      %1384 = vmatpush1.msra.mxu0 0.0
      %1385 = vmatprep.subr.mxu0 0.0
      %1386 = vmatpush1.msra.mxu0 0.0
      %1387 = vmatprep.subr.mxu0 0.0
      %1388 = vmatpush1.msra.mxu0 0.0
      %1389 = vmatprep.subr.mxu0 0.0
      %1390 = vmatpush1.msra.mxu0 0.0
      %1391 = vmatprep.subr.mxu0 0.0
      %1392 = vmatpush1.msra.mxu0 0.0
      %1393 = vmatprep.subr.mxu0 0.0
      %1394 = vmatpush1.msra.mxu0 0.0
      %1395 = vmatprep.subr.mxu0 0.0
      %1396 = vmatpush1.msra.mxu0 0.0
      %1397 = vmatprep.subr.mxu0 0.0
      %1398 = vmatpush1.msra.mxu0 0.0
      %1399 = vmatprep.subr.mxu0 0.0
      %1400 = vmatpush1.msra.mxu0 0.0
      %1401 = vmatprep.subr.mxu0 0.0
      %1402 = vmatpush1.msra.mxu0 0.0
      %1403 = vmatprep.subr.mxu0 0.0
      %1404 = vmatpush1.msra.mxu0 0.0
      %1405 = vmatprep.subr.mxu0 0.0
      %1406 = vmatpush1.msra.mxu0 %v1373
      %1407 = vmatprep.subr.mxu0 0.0
      %1408 = vmatpush2.msra.mxu0 0.0
      %1409 = vmatprep.subr.mxu0 0.0
      %1410 = vmatpush2.msra.mxu0 0.0
      %1411 = vmatprep.subr.mxu0 0.0
      %1412 = vmatpush2.msra.mxu0 0.0
      %1413 = vmatprep.subr.mxu0 0.0
      %1414 = vmatpush2.msra.mxu0 0.0
      %1415 = vmatprep.subr.mxu0 0.0
      %1416 = vmatpush2.msra.mxu0 0.0
      %1417 = vmatprep.subr.mxu0 0.0
      %1418 = vmatpush2.msra.mxu0 0.0
      %1419 = vmatprep.subr.mxu0 0.0
      %1420 = vmatpush2.msra.mxu0 0.0
      %1421 = vmatprep.subr.mxu0 0.0
      %1422 = vmatpush2.msra.mxu0 0.0
      %1423 = vmatprep.subr.mxu0 0.0
      %1424 = vmatpush2.msra.mxu0 0.0
      %1425 = vmatprep.subr.mxu0 0.0
      %1426 = vmatpush2.msra.mxu0 0.0
      %1427 = vmatprep.subr.mxu0 0.0
      %1428 = vmatpush2.msra.mxu0 0.0
      %1429 = vmatprep.subr.mxu0 0.0
      %1430 = vmatpush2.msra.mxu0 0.0
      %1431 = vmatprep.subr.mxu0 0.0
      %1432 = vmatpush2.msra.mxu0 0.0
      %1433 = vmatprep.subr.mxu0 0.0
      %1434 = vmatpush2.msra.mxu0 0.0
      %1435 = vmatprep.subr.mxu0 0.0
      %1436 = vmatpush2.msra.mxu0 0.0
      %1437 = vmatprep.subr.mxu0 0.0
      %1438 = vmatpush2.msra.mxu0 0.0
      %1439 = vmatprep.mubr.f32.mxu0 0.0
      %1440 = vmatmul.mubr.f32.gmra.mxu0 %v622
      %v1441 = vpop.f32.mrf.mxu0
      %v1442 = vadd.f32 0.0, %v1441
      %v1443 = vpop.f32.mrf.mxu0
      %1444 = vmatprep.mubr.f32.mxu0 0.0
      %1445 = vmatmul.mubr.f32.gmra.mxu0 %v625
      %v1446 = vpop.f32.mrf.mxu0
      %v1447 = vadd.f32 0.0, %v1446
      %v1448 = vpop.f32.mrf.mxu0
      %1449 = vmatprep.mubr.f32.mxu0 0.0
      %1450 = vmatmul.mubr.f32.gmra.mxu0 %v628
      %v1451 = vpop.f32.mrf.mxu0
      %v1452 = vadd.f32 0.0, %v1451
      %v1453 = vpop.f32.mrf.mxu0
      %1454 = vmatprep.mubr.f32.mxu0 0.0
      %1455 = vmatmul.mubr.f32.gmra.mxu0 %v631
      %v1456 = vpop.f32.mrf.mxu0
      %v1457 = vadd.f32 0.0, %v1456
      %v1458 = vpop.f32.mrf.mxu0
      %1459 = vmatprep.mubr.f32.mxu0 0.0
      %1460 = vmatmul.mubr.f32.gmra.mxu0 %v634
      %v1461 = vpop.f32.mrf.mxu0
      %v1462 = vadd.f32 0.0, %v1461
      %v1463 = vpop.f32.mrf.mxu0
      %1464 = vmatprep.mubr.f32.mxu0 0.0
      %1465 = vmatmul.mubr.f32.gmra.mxu0 %v637
      %v1466 = vpop.f32.mrf.mxu0
      %v1467 = vadd.f32 0.0, %v1466
      %v1468 = vpop.f32.mrf.mxu0
      %1469 = vmatprep.mubr.f32.mxu0 0.0
      %1470 = vmatmul.mubr.f32.gmra.mxu0 %v640
      %v1471 = vpop.f32.mrf.mxu0
      %v1472 = vadd.f32 0.0, %v1471
      %v1473 = vpop.f32.mrf.mxu0
      %1474 = vmatprep.mubr.f32.mxu0 0.0
      %1475 = vmatmul.mubr.f32.gmra.mxu0 %v1370
      %v1476 = vpop.f32.mrf.mxu0
      %v1477 = vadd.f32 0.0, %v1476
      %v1478 = vpop.f32.mrf.mxu0
      %1479 = vdwg.mxu0
      %v1480 = vadd.f32 %v1359, %v1442
      %v1481 = vadd.f32 %v1360, %v1447
      %v1482 = vadd.f32 %v1361, %v1452
      %v1483 = vadd.f32 %v1362, %v1457
      %v1484 = vadd.f32 %v1363, %v1462
      %v1485 = vadd.f32 %v1364, %v1467
      %v1486 = vadd.f32 %v1365, %v1472
      %v1487 = vadd.f32 %v1366, %v1477
      %s1488 = scalar_lea.vmem %s413, 28
      %v1489 = vld [vmem:[%s1488] sm:$0xf]
      %v1491 = vsel %vm484, %v456, 0
      %v1494 = vsel %vm509, %v1489, 0
      %1496 = vmatprep.subr.mxu0 0.0
      %1497 = vmatpush1.msra.mxu0 0.0
      %1498 = vmatprep.subr.mxu0 0.0
      %1499 = vmatpush1.msra.mxu0 0.0
      %1500 = vmatprep.subr.mxu0 0.0
      %1501 = vmatpush1.msra.mxu0 0.0
      %1502 = vmatprep.subr.mxu0 0.0
      %1503 = vmatpush1.msra.mxu0 0.0
      %1504 = vmatprep.subr.mxu0 0.0
      %1505 = vmatpush1.msra.mxu0 0.0
      %1506 = vmatprep.subr.mxu0 0.0
      %1507 = vmatpush1.msra.mxu0 0.0
      %1508 = vmatprep.subr.mxu0 0.0
      %1509 = vmatpush1.msra.mxu0 0.0
      %1510 = vmatprep.subr.mxu0 0.0
      %1511 = vmatpush1.msra.mxu0 0.0
      %1512 = vmatprep.subr.mxu0 0.0
      %1513 = vmatpush1.msra.mxu0 0.0
      %1514 = vmatprep.subr.mxu0 0.0
      %1515 = vmatpush1.msra.mxu0 0.0
      %1516 = vmatprep.subr.mxu0 0.0
      %1517 = vmatpush1.msra.mxu0 0.0
      %1518 = vmatprep.subr.mxu0 0.0
      %1519 = vmatpush1.msra.mxu0 0.0
      %1520 = vmatprep.subr.mxu0 0.0
      %1521 = vmatpush1.msra.mxu0 0.0
      %1522 = vmatprep.subr.mxu0 0.0
      %1523 = vmatpush1.msra.mxu0 0.0
      %1524 = vmatprep.subr.mxu0 0.0
      %1525 = vmatpush1.msra.mxu0 0.0
      %1526 = vmatprep.subr.mxu0 0.0
      %1527 = vmatpush1.msra.mxu0 %v1494
      %1528 = vmatprep.subr.mxu0 0.0
      %1529 = vmatpush2.msra.mxu0 0.0
      %1530 = vmatprep.subr.mxu0 0.0
      %1531 = vmatpush2.msra.mxu0 0.0
      %1532 = vmatprep.subr.mxu0 0.0
      %1533 = vmatpush2.msra.mxu0 0.0
      %1534 = vmatprep.subr.mxu0 0.0
      %1535 = vmatpush2.msra.mxu0 0.0
      %1536 = vmatprep.subr.mxu0 0.0
      %1537 = vmatpush2.msra.mxu0 0.0
      %1538 = vmatprep.subr.mxu0 0.0
      %1539 = vmatpush2.msra.mxu0 0.0
      %1540 = vmatprep.subr.mxu0 0.0
      %1541 = vmatpush2.msra.mxu0 0.0
      %1542 = vmatprep.subr.mxu0 0.0
      %1543 = vmatpush2.msra.mxu0 0.0
      %1544 = vmatprep.subr.mxu0 0.0
      %1545 = vmatpush2.msra.mxu0 0.0
      %1546 = vmatprep.subr.mxu0 0.0
      %1547 = vmatpush2.msra.mxu0 0.0
      %1548 = vmatprep.subr.mxu0 0.0
      %1549 = vmatpush2.msra.mxu0 0.0
      %1550 = vmatprep.subr.mxu0 0.0
      %1551 = vmatpush2.msra.mxu0 0.0
      %1552 = vmatprep.subr.mxu0 0.0
      %1553 = vmatpush2.msra.mxu0 0.0
      %1554 = vmatprep.subr.mxu0 0.0
      %1555 = vmatpush2.msra.mxu0 0.0
      %1556 = vmatprep.subr.mxu0 0.0
      %1557 = vmatpush2.msra.mxu0 0.0
      %1558 = vmatprep.subr.mxu0 0.0
      %1559 = vmatpush2.msra.mxu0 0.0
      %1560 = vmatprep.mubr.f32.mxu0 0.0
      %1561 = vmatmul.mubr.f32.gmra.mxu0 %v489
      %v1562 = vpop.f32.mrf.mxu0
      %v1563 = vadd.f32 0.0, %v1562
      %v1564 = vpop.f32.mrf.mxu0
      %1565 = vmatprep.mubr.f32.mxu0 0.0
      %1566 = vmatmul.mubr.f32.gmra.mxu0 %v492
      %v1567 = vpop.f32.mrf.mxu0
      %v1568 = vadd.f32 0.0, %v1567
      %v1569 = vpop.f32.mrf.mxu0
      %1570 = vmatprep.mubr.f32.mxu0 0.0
      %1571 = vmatmul.mubr.f32.gmra.mxu0 %v495
      %v1572 = vpop.f32.mrf.mxu0
      %v1573 = vadd.f32 0.0, %v1572
      %v1574 = vpop.f32.mrf.mxu0
      %1575 = vmatprep.mubr.f32.mxu0 0.0
      %1576 = vmatmul.mubr.f32.gmra.mxu0 %v498
      %v1577 = vpop.f32.mrf.mxu0
      %v1578 = vadd.f32 0.0, %v1577
      %v1579 = vpop.f32.mrf.mxu0
      %1580 = vmatprep.mubr.f32.mxu0 0.0
      %1581 = vmatmul.mubr.f32.gmra.mxu0 %v501
      %v1582 = vpop.f32.mrf.mxu0
      %v1583 = vadd.f32 0.0, %v1582
      %v1584 = vpop.f32.mrf.mxu0
      %1585 = vmatprep.mubr.f32.mxu0 0.0
      %1586 = vmatmul.mubr.f32.gmra.mxu0 %v504
      %v1587 = vpop.f32.mrf.mxu0
      %v1588 = vadd.f32 0.0, %v1587
      %v1589 = vpop.f32.mrf.mxu0
      %1590 = vmatprep.mubr.f32.mxu0 0.0
      %1591 = vmatmul.mubr.f32.gmra.mxu0 %v507
      %v1592 = vpop.f32.mrf.mxu0
      %v1593 = vadd.f32 0.0, %v1592
      %v1594 = vpop.f32.mrf.mxu0
      %1595 = vmatprep.mubr.f32.mxu0 0.0
      %1596 = vmatmul.mubr.f32.gmra.mxu0 %v1491
      %v1597 = vpop.f32.mrf.mxu0
      %v1598 = vadd.f32 0.0, %v1597
      %v1599 = vpop.f32.mrf.mxu0
      %1600 = vdwg.mxu0
      %v1601 = vadd.f32 %v1480, %v1563
      %v1602 = vadd.f32 %v1481, %v1568
      %v1603 = vadd.f32 %v1482, %v1573
      %v1604 = vadd.f32 %v1483, %v1578
      %v1605 = vadd.f32 %v1484, %v1583
      %v1606 = vadd.f32 %v1485, %v1588
      %v1607 = vadd.f32 %v1486, %v1593
      %v1608 = vadd.f32 %v1487, %v1598
      %v1610 = vrot.slane %v446, 1
      %v1611 = vrot.slane %v447, 1
      %v1612 = vsel %vm758, %v1610, %v1611
      %s1613 = scalar_lea.vmem %s413, 32
      %v1614 = vld [vmem:[%s1613] sm:$0xf]
      %v1615 = vsel %vm484, %v1612, 0
      %v1618 = vsel %vm509, %v1614, 0
      %1620 = vmatprep.subr.mxu0 0.0
      %1621 = vmatpush1.msra.mxu0 0.0
      %1622 = vmatprep.subr.mxu0 0.0
      %1623 = vmatpush1.msra.mxu0 0.0
      %1624 = vmatprep.subr.mxu0 0.0
      %1625 = vmatpush1.msra.mxu0 0.0
      %1626 = vmatprep.subr.mxu0 0.0
      %1627 = vmatpush1.msra.mxu0 0.0
      %1628 = vmatprep.subr.mxu0 0.0
      %1629 = vmatpush1.msra.mxu0 0.0
      %1630 = vmatprep.subr.mxu0 0.0
      %1631 = vmatpush1.msra.mxu0 0.0
      %1632 = vmatprep.subr.mxu0 0.0
      %1633 = vmatpush1.msra.mxu0 0.0
      %1634 = vmatprep.subr.mxu0 0.0
      %1635 = vmatpush1.msra.mxu0 0.0
      %1636 = vmatprep.subr.mxu0 0.0
      %1637 = vmatpush1.msra.mxu0 0.0
      %1638 = vmatprep.subr.mxu0 0.0
      %1639 = vmatpush1.msra.mxu0 0.0
      %1640 = vmatprep.subr.mxu0 0.0
      %1641 = vmatpush1.msra.mxu0 0.0
      %1642 = vmatprep.subr.mxu0 0.0
      %1643 = vmatpush1.msra.mxu0 0.0
      %1644 = vmatprep.subr.mxu0 0.0
      %1645 = vmatpush1.msra.mxu0 0.0
      %1646 = vmatprep.subr.mxu0 0.0
      %1647 = vmatpush1.msra.mxu0 0.0
      %1648 = vmatprep.subr.mxu0 0.0
      %1649 = vmatpush1.msra.mxu0 0.0
      %1650 = vmatprep.subr.mxu0 0.0
      %1651 = vmatpush1.msra.mxu0 %v1618
      %1652 = vmatprep.subr.mxu0 0.0
      %1653 = vmatpush2.msra.mxu0 0.0
      %1654 = vmatprep.subr.mxu0 0.0
      %1655 = vmatpush2.msra.mxu0 0.0
      %1656 = vmatprep.subr.mxu0 0.0
      %1657 = vmatpush2.msra.mxu0 0.0
      %1658 = vmatprep.subr.mxu0 0.0
      %1659 = vmatpush2.msra.mxu0 0.0
      %1660 = vmatprep.subr.mxu0 0.0
      %1661 = vmatpush2.msra.mxu0 0.0
      %1662 = vmatprep.subr.mxu0 0.0
      %1663 = vmatpush2.msra.mxu0 0.0
      %1664 = vmatprep.subr.mxu0 0.0
      %1665 = vmatpush2.msra.mxu0 0.0
      %1666 = vmatprep.subr.mxu0 0.0
      %1667 = vmatpush2.msra.mxu0 0.0
      %1668 = vmatprep.subr.mxu0 0.0
      %1669 = vmatpush2.msra.mxu0 0.0
      %1670 = vmatprep.subr.mxu0 0.0
      %1671 = vmatpush2.msra.mxu0 0.0
      %1672 = vmatprep.subr.mxu0 0.0
      %1673 = vmatpush2.msra.mxu0 0.0
      %1674 = vmatprep.subr.mxu0 0.0
      %1675 = vmatpush2.msra.mxu0 0.0
      %1676 = vmatprep.subr.mxu0 0.0
      %1677 = vmatpush2.msra.mxu0 0.0
      %1678 = vmatprep.subr.mxu0 0.0
      %1679 = vmatpush2.msra.mxu0 0.0
      %1680 = vmatprep.subr.mxu0 0.0
      %1681 = vmatpush2.msra.mxu0 0.0
      %1682 = vmatprep.subr.mxu0 0.0
      %1683 = vmatpush2.msra.mxu0 0.0
      %1684 = vmatprep.mubr.f32.mxu0 0.0
      %1685 = vmatmul.mubr.f32.gmra.mxu0 %v787
      %v1686 = vpop.f32.mrf.mxu0
      %v1687 = vadd.f32 0.0, %v1686
      %v1688 = vpop.f32.mrf.mxu0
      %1689 = vmatprep.mubr.f32.mxu0 0.0
      %1690 = vmatmul.mubr.f32.gmra.mxu0 %v789
      %v1691 = vpop.f32.mrf.mxu0
      %v1692 = vadd.f32 0.0, %v1691
      %v1693 = vpop.f32.mrf.mxu0
      %1694 = vmatprep.mubr.f32.mxu0 0.0
      %1695 = vmatmul.mubr.f32.gmra.mxu0 %v791
      %v1696 = vpop.f32.mrf.mxu0
      %v1697 = vadd.f32 0.0, %v1696
      %v1698 = vpop.f32.mrf.mxu0
      %1699 = vmatprep.mubr.f32.mxu0 0.0
      %1700 = vmatmul.mubr.f32.gmra.mxu0 %v793
      %v1701 = vpop.f32.mrf.mxu0
      %v1702 = vadd.f32 0.0, %v1701
      %v1703 = vpop.f32.mrf.mxu0
      %1704 = vmatprep.mubr.f32.mxu0 0.0
      %1705 = vmatmul.mubr.f32.gmra.mxu0 %v795
      %v1706 = vpop.f32.mrf.mxu0
      %v1707 = vadd.f32 0.0, %v1706
      %v1708 = vpop.f32.mrf.mxu0
      %1709 = vmatprep.mubr.f32.mxu0 0.0
      %1710 = vmatmul.mubr.f32.gmra.mxu0 %v797
      %v1711 = vpop.f32.mrf.mxu0
      %v1712 = vadd.f32 0.0, %v1711
      %v1713 = vpop.f32.mrf.mxu0
      %1714 = vmatprep.mubr.f32.mxu0 0.0
      %1715 = vmatmul.mubr.f32.gmra.mxu0 %v799
      %v1716 = vpop.f32.mrf.mxu0
      %v1717 = vadd.f32 0.0, %v1716
      %v1718 = vpop.f32.mrf.mxu0
      %1719 = vmatprep.mubr.f32.mxu0 0.0
      %1720 = vmatmul.mubr.f32.gmra.mxu0 %v1615
      %v1721 = vpop.f32.mrf.mxu0
      %v1722 = vadd.f32 0.0, %v1721
      %v1723 = vpop.f32.mrf.mxu0
      %1724 = vdwg.mxu0
      %v1725 = vadd.f32 %v1601, %v1687
      %v1726 = vadd.f32 %v1602, %v1692
      %v1727 = vadd.f32 %v1603, %v1697
      %v1728 = vadd.f32 %v1604, %v1702
      %v1729 = vadd.f32 %v1605, %v1707
      %v1730 = vadd.f32 %v1606, %v1712
      %v1731 = vadd.f32 %v1607, %v1717
      %v1732 = vadd.f32 %v1608, %v1722
      %v1733 = vld [vmem:[%s416] sm:$0x1]
      %v1735 = vlaneseq
      %v1736 = vshrl.u32 %v1735, 7
      %v1737 = vsub.s32 0, %v1736
      %v1738 = vrot.slane %v1733, %v1737
      %v1740 = vadd.f32 %v1725, %v1738
      %v1741 = vadd.f32 %v1726, %v1738
      %v1742 = vadd.f32 %v1727, %v1738
      %v1743 = vadd.f32 %v1728, %v1738
      %v1744 = vadd.f32 %v1729, %v1738
      %v1745 = vadd.f32 %v1730, %v1738
      %v1746 = vadd.f32 %v1731, %v1738
      %v1747 = vadd.f32 %v1732, %v1738
      %1748 = vst.msk [vmem:[%s428] sm:$0xff] %vm484, %v1740
      %1749 = vst.msk [vmem:[%s428 + $0x8] sm:$0xff] %vm484, %v1741
      %1750 = vst.msk [vmem:[%s428 + $0x10] sm:$0xff] %vm484, %v1742
      %1751 = vst.msk [vmem:[%s428 + $0x18] sm:$0xff] %vm484, %v1743
      %1752 = vst.msk [vmem:[%s428 + $0x20] sm:$0xff] %vm484, %v1744
      %1753 = vst.msk [vmem:[%s428 + $0x28] sm:$0xff] %vm484, %v1745
      %1754 = vst.msk [vmem:[%s428 + $0x30] sm:$0xff] %vm484, %v1746
      %1755 = vst.msk [vmem:[%s428 + $0x38] sm:$0xff] %vm484, %v1747
      %s1756 = smul.u32 8, %s24
      %p1757 = scmp.lt.s32.totalorder %s22, 1
      %s1758 = scalar_select %p1757, %s22, 1
      %p1759 = scmp.lt.s32.totalorder %s1756, 7
      %s1760 = scalar_select %p1759, %s1756, 7
      %p1761 = scmp.lt.s32.totalorder %s23, 0
      %s1762 = scalar_select %p1761, %s23, 0
      %s1763 = sadd.s32 %s1762, %s1760
      %s1764 = smul.addr %s1758, 8
      %s1765 = sadd.s32 %s1763, %s1764
      %s1766 = smul.addr %s1765, 8
      %s1767 = scalar_lea.vmem %s6, %s1766
      // Predicated region
      $region45: #{downsample.1} parent=43 // pred_check
        %p1768 = pneg %p222
      $region46: #{downsample.1} parent=43 // pred_check_branch
        %1770 = sbr.rel (%p1768) target = $region48
      $region47: #{downsample.1} parent=43 // pred_region
        %s1771 = smul.u32 8, %s24
      $region48: #{downsample.1} parent=43 // pred_fallthru
        _
    $region44: #{downsample.1} parent=5 // pred_fallthru
      _
    %p1772 = scmp.le.s32.totalorder 2, %s12
    // Predicated region
    $region49: #{downsample.1} parent=5 // pred_check
      %p1773 = pneg %p1772
    $region50: #{downsample.1} parent=5 // pred_check_branch
      %1775 = sbr.rel (%p1773) target = $region52
    $region51: #{downsample.1} parent=5 // pred_region
      %s1776 = ssub.s32 %s12, 2
      // Predicated region
      $region53: #{downsample.1} parent=51 // pred_check
        %p1777 = pneg %p228
      $region54: #{downsample.1} parent=51 // pred_check_branch
        %1779 = sbr.rel (%p1777) target = $region56
      $region55: #{downsample.1} parent=51 // pred_region
        %s1780 = smul.u32 8, %s27
        %p1781 = scmp.lt.s32.totalorder %s25, 1
        %s1782 = scalar_select %p1781, %s25, 1
        %p1783 = scmp.lt.s32.totalorder %s1780, 7
        %s1784 = scalar_select %p1783, %s1780, 7
        %p1785 = scmp.lt.s32.totalorder %s26, 0
        %s1786 = scalar_select %p1785, %s26, 0
        %s1787 = sadd.s32 %s1786, %s1784
        %s1788 = smul.addr %s1782, 8
        %s1789 = sadd.s32 %s1787, %s1788
        %s1790 = smul.addr %s1789, 8
        %s1791 = scalar_lea.vmem %s6, %s1790
      $region56: #{downsample.1} parent=51 // pred_fallthru
        _
    $region52: #{downsample.1} parent=5 // pred_fallthru
      _
  $region6: #{downsample.1} parent=0 // loop_footer
    %s16 = sadd.s32 1, %s12
  $region7: #{downsample.1} parent=0 // loop_footer_branch
    %11 = sbr.rel target = $region3
  $region8: #{downsample.1} parent=0 // loop_exit
    _

</llo_original>
